<compile_context>
chip_gen: v5e
topology: v5e:2x2
jax: 0.10.0
libtpu: 0.0.40
codegen_flags: <defaults>
</compile_context>

<pallas_src>
import functools
import math

import jax
import jax.numpy as jnp
from jax.experimental import pallas as pl
from jax.experimental.pallas import tpu as pltpu


# ------------------------------------------------------------------ helpers

def _round_up(n, m):
    return ((n + m - 1) // m) * m


def _pick_tile(dim, max_tile):
    """Largest multiple of 128 <= max_tile that divides dim (dim % 128 == 0)."""
    best = 128
    for t in range(256, max_tile + 1, 128):
        if dim % t == 0:
            best = t
    return best


# -------------------------------------------------------- matmul+BN kernels

def _mm_bn_kernel(p_ref, w_ref, s_ref, b_ref, o_ref, acc_ref, *, relu):
    """acc += p @ w (bf16 MXU, f32 acc); epilogue: BN affine (+ReLU)."""
    @pl.when(pl.program_id(2) == 0)
    def _():
        acc_ref[...] = jnp.zeros_like(acc_ref)

    acc_ref[...] += jnp.dot(p_ref[...], w_ref[...],
                            preferred_element_type=jnp.float32)

    @pl.when(pl.program_id(2) == pl.num_programs(2) - 1)
    def _():
        y = acc_ref[...] * s_ref[...] + b_ref[...]
        if relu:
            y = jnp.maximum(y, 0.0)
        o_ref[...] = y.astype(o_ref.dtype)


def _mm_bn_res_kernel(p_ref, w_ref, s_ref, b_ref, r_ref, o_ref, acc_ref, *,
                      relu):
    """Same as _mm_bn_kernel but with a fused residual add before the ReLU."""
    @pl.when(pl.program_id(2) == 0)
    def _():
        acc_ref[...] = jnp.zeros_like(acc_ref)

    acc_ref[...] += jnp.dot(p_ref[...], w_ref[...],
                            preferred_element_type=jnp.float32)

    @pl.when(pl.program_id(2) == pl.num_programs(2) - 1)
    def _():
        y = (acc_ref[...] * s_ref[...] + b_ref[...]
             + r_ref[...].astype(jnp.float32))
        if relu:
            y = jnp.maximum(y, 0.0)
        o_ref[...] = y.astype(o_ref.dtype)


@functools.lru_cache(maxsize=None)
def _matmul_bn_fn(M_pad, K, C, tm, tn, tk, relu, has_res):
    grid = (M_pad // tm, C // tn, K // tk)
    in_specs = [
        pl.BlockSpec((tm, tk), lambda i, j, k: (i, k)),   # patches
        pl.BlockSpec((tk, tn), lambda i, j, k: (k, j)),   # weights
        pl.BlockSpec((1, tn), lambda i, j, k: (0, j)),    # BN scale
        pl.BlockSpec((1, tn), lambda i, j, k: (0, j)),    # BN bias
    ]
    if has_res:
        in_specs.append(pl.BlockSpec((tm, tn), lambda i, j, k: (i, j)))
        kernel = functools.partial(_mm_bn_res_kernel, relu=relu)
    else:
        kernel = functools.partial(_mm_bn_kernel, relu=relu)

    fn = pl.pallas_call(
        kernel,
        out_shape=jax.ShapeDtypeStruct((M_pad, C), jnp.bfloat16),
        grid=grid,
        in_specs=in_specs,
        out_specs=pl.BlockSpec((tm, tn), lambda i, j, k: (i, j)),
        scratch_shapes=[pltpu.VMEM((tm, tn), jnp.float32)],
        compiler_params=pltpu.CompilerParams(
            dimension_semantics=("parallel", "parallel", "arbitrary"),
            vmem_limit_bytes=32 * 1024 * 1024),
    )
    return jax.jit(fn)


def matmul_bn(patches, wmat, scale, bias, residual=None, relu=True):
    """out = relu?((patches @ wmat) * scale + bias (+ residual)), bf16 out."""
    M, K = patches.shape
    _, C = wmat.shape
    M_pad = _round_up(M, 128)
    tm = _pick_tile(M_pad, 512)
    tn = _pick_tile(C, 512)
    tk = _pick_tile(K, 512)

    p = patches.astype(jnp.bfloat16)
    if M_pad != M:
        p = jnp.pad(p, ((0, M_pad - M), (0, 0)))
    args = [p, wmat, scale, bias]
    if residual is not None:
        r = residual.astype(jnp.bfloat16)
        if M_pad != M:
            r = jnp.pad(r, ((0, M_pad - M), (0, 0)))
        args.append(r)

    fn = _matmul_bn_fn(M_pad, K, C, tm, tn, tk, bool(relu),
                       residual is not None)
    out = fn(*args)
    return out[:M] if M_pad != M else out


# ------------------------------------------------- fused bottleneck kernel

def _bottleneck_kernel(x_ref, w1_ref, s1_ref, b1_ref,
                       w2_ref, s2_ref, b2_ref,
                       w3_ref, s3_ref, b3_ref,
                       o_ref, t1p_ref, *, H, W):
    """Fused 1x1 -> 3x3(stride1,pad1) -> 1x1 bottleneck + identity residual.

    The 3x3 conv uses implicit im2col: the intermediate t1 lives in a zero
    padded VMEM scratch and each of the 9 taps is a row-shifted, boundary
    masked matmul accumulated in f32 (no patch matrix ever touches HBM).
    """
    M, Cin = x_ref.shape
    P = w1_ref.shape[1]
    Cout = w3_ref.shape[1]
    margin = _round_up(W + 1, 8)          # aligned store offset into scratch

    # ---- conv1 (1x1) + BN + ReLU
    acc = jnp.zeros((M, P), jnp.float32)
    ck = 512 if Cin % 512 == 0 else Cin
    for k0 in range(0, Cin, ck):
        acc = acc + jnp.dot(x_ref[:, k0:k0 + ck], w1_ref[k0:k0 + ck, :],
                            preferred_element_type=jnp.float32)
    t1 = jnp.maximum(acc * s1_ref[...] + b1_ref[...], 0.0).astype(jnp.bfloat16)

    t1p_ref[...] = jnp.zeros_like(t1p_ref)
    t1p_ref[margin:margin + M, :] = t1

    # ---- conv2 (3x3, stride 1, pad 1) via 9 masked shifted matmuls
    row = jax.lax.broadcasted_iota(jnp.int32, (M, 1), 0)
    y0 = (row // W) % H
    x0 = row % W
    acc = jnp.zeros((M, P), jnp.float32)
    for di in range(3):
        for dj in range(3):
            off = (di - 1) * W + (dj - 1)
            sh = t1p_ref[margin + off:margin + off + M, :]
            valid = ((y0 + (di - 1) >= 0) & (y0 + (di - 1) < H) &
                     (x0 + (dj - 1) >= 0) & (x0 + (dj - 1) < W))
            sh = jnp.where(valid, sh, jnp.zeros_like(sh))
            acc = acc + jnp.dot(sh, w2_ref[di * 3 + dj],
                                preferred_element_type=jnp.float32)
    t2 = jnp.maximum(acc * s2_ref[...] + b2_ref[...], 0.0).astype(jnp.bfloat16)

    # ---- conv3 (1x1) + BN + identity residual + ReLU (chunked over Cout)
    cn = 512 if Cout % 512 == 0 else Cout
    for c0 in range(0, Cout, cn):
        y = jnp.dot(t2, w3_ref[:, c0:c0 + cn],
                    preferred_element_type=jnp.float32)
        y = (y * s3_ref[:, c0:c0 + cn] + b3_ref[:, c0:c0 + cn]
             + x_ref[:, c0:c0 + cn].astype(jnp.float32))
        o_ref[:, c0:c0 + cn] = jnp.maximum(y, 0.0).astype(o_ref.dtype)


@functools.lru_cache(maxsize=None)
def _bottleneck_fn(M, H, W, Cin, P, Cout):
    margin = _round_up(W + 1, 8)
    rows = margin + M + W + 1
    kernel = functools.partial(_bottleneck_kernel, H=H, W=W)
    fn = pl.pallas_call(
        kernel,
        out_shape=jax.ShapeDtypeStruct((M, Cout), jnp.bfloat16),
        scratch_shapes=[pltpu.VMEM((rows, P), jnp.bfloat16)],
        compiler_params=pltpu.CompilerParams(
            vmem_limit_bytes=32 * 1024 * 1024),
    )
    return jax.jit(fn)


# ------------------------------------------------------------- mean kernel

def _mean_kernel(x_ref, o_ref):
    o_ref[...] = jnp.mean(x_ref[...].astype(jnp.float32), axis=1,
                          keepdims=True)


@functools.lru_cache(maxsize=None)
def _mean_fn(N, HW, C):
    fn = pl.pallas_call(
        _mean_kernel,
        out_shape=jax.ShapeDtypeStruct((N, 1, C), jnp.float32),
        grid=(1,),
        in_specs=[pl.BlockSpec((N, HW, C), lambda i: (0, 0, 0))],
        out_specs=pl.BlockSpec((N, 1, C), lambda i: (0, 0, 0)),
    )
    return jax.jit(fn)


# --------------------------------------------------------------- wrappers

def _im2col(x, kh, kw, stride, pad):
    """x: (N, H, W, C) -> (N*oh*ow, kh*kw*C), ordering (kh, kw, C)."""
    N, H, W, C = x.shape
    xp = jnp.pad(x, ((0, 0), (pad, pad), (pad, pad), (0, 0)))
    Hp, Wp = H + 2 * pad, W + 2 * pad
    oh = (Hp - kh) // stride + 1
    ow = (Wp - kw) // stride + 1
    cols = []
    for i in range(kh):
        for j in range(kw):
            cols.append(xp[:, i:i + stride * oh:stride,
                           j:j + stride * ow:stride, :])
    patches = jnp.stack(cols, axis=3)                 # (N, oh, ow, kh*kw, C)
    return patches.reshape(N * oh * ow, kh * kw * C), (N, oh, ow)


def conv_bn(x, conv, scale, bias, stride, pad, relu=True, residual=None):
    """PyTorch-semantics Conv2d (no bias) + folded BN (+residual) (+ReLU)."""
    k, cout = conv["k"], conv["cout"]
    N = x.shape[0]
    if k == 1:
        xs = x[:, ::stride, ::stride, :] if stride > 1 else x
        _, oh, ow, cin = xs.shape
        patches = xs.reshape(N * oh * ow, cin)
    else:
        patches, (N, oh, ow) = _im2col(x, k, k, stride, pad)
    Kp = patches.shape[1]
    if conv["K_pad"] != Kp:
        patches = jnp.pad(patches, ((0, 0), (0, conv["K_pad"] - Kp)))
    res_flat = (residual.reshape(N * oh * ow, cout)
                if residual is not None else None)
    out = matmul_bn(patches, conv["wmat"], scale, bias,
                    residual=res_flat, relu=relu)
    return out.reshape(N, oh, ow, cout)


def maxpool_3x3_s2(x):
    """MaxPool2d(kernel=3, stride=2, padding=1) as a shifted-slice max tree."""
    N, H, W, C = x.shape
    xp = jnp.pad(x, ((0, 0), (1, 1), (1, 1), (0, 0)),
                 constant_values=-jnp.inf)
    Hp, Wp = H + 2, W + 2
    oh = (Hp - 3) // 2 + 1
    ow = (Wp - 3) // 2 + 1
    m = None
    for dj in range(3):                        # reduce along W first
        v = jax.lax.slice(xp, (0, 0, dj, 0),
                          (N, Hp, dj + 2 * (ow - 1) + 1, C), (1, 1, 2, 1))
        m = v if m is None else jnp.maximum(m, v)
    out = None
    for di in range(3):                        # then along H
        v = jax.lax.slice(m, (0, di, 0, 0),
                          (N, di + 2 * (oh - 1) + 1, ow, C), (1, 2, 1, 1))
        out = v if out is None else jnp.maximum(out, v)
    return out


def global_mean(x):
    """torch.mean over W then H (keepdim) on NHWC -> NCHW (N, C, 1, 1)."""
    N, H, W, C = x.shape
    xr = x.reshape(N, H * W, C)
    out = _mean_fn(N, H * W, C)(xr)                    # (N, 1, C) f32
    return jnp.transpose(out, (0, 2, 1)).reshape(N, C, 1, 1)


# ------------------------------------------------------------ parameters

def _make_conv(key, cout, cin, k, cin_pad, cout_pad):
    fan_in = cin * k * k
    w = jax.random.normal(key, (k, k, cin, cout), jnp.float32) / math.sqrt(fan_in)
    if cin_pad != cin or cout_pad != cout:
        # Zero padding keeps the padded channels exactly zero downstream.
        w = jnp.pad(w, ((0, 0), (0, 0), (0, cin_pad - cin),
                        (0, cout_pad - cout)))
    wmat = w.reshape(k * k * cin_pad, cout_pad)
    K = wmat.shape[0]
    K_pad = _round_up(K, 128)
    if K_pad != K:
        wmat = jnp.pad(wmat, ((0, K_pad - K), (0, 0)))
    conv = {"wmat": wmat.astype(jnp.bfloat16), "k": k,
            "cin": cin_pad, "cout": cout_pad, "K": K, "K_pad": K_pad}
    if k == 3:
        conv["wtap"] = w.reshape(9, cin_pad, cout_pad).astype(jnp.bfloat16)
    return conv


def _make_bn(key, c, c_pad):
    k1, k2, k3, k4 = jax.random.split(key, 4)
    gamma = 1.0 + 0.1 * jax.random.normal(k1, (c,), jnp.float32)
    beta = 0.1 * jax.random.normal(k2, (c,), jnp.float32)
    mean = 0.1 * jax.random.normal(k3, (c,), jnp.float32)
    var = 1.0 + 0.1 * jax.random.uniform(k4, (c,), jnp.float32)
    scale = gamma / jnp.sqrt(var + 1e-5)
    bias = beta - mean * scale
    if c_pad != c:
        scale = jnp.pad(scale, (0, c_pad - c))
        bias = jnp.pad(bias, (0, c_pad - c))
    return scale.reshape(1, c_pad), bias.reshape(1, c_pad)


def _make_bottleneck(key, cin, cin_pad, planes, stride):
    cout = planes * 4
    p_pad = max(planes, 128)        # lane-dense: pad 64-wide stages to 128
    ks = jax.random.split(key, 8)
    p = {"stride": stride}
    p["c1"] = _make_conv(ks[0], planes, cin, 1, cin_pad, p_pad)
    p["s1"], p["b1"] = _make_bn(ks[1], planes, p_pad)
    p["c2"] = _make_conv(ks[2], planes, planes, 3, p_pad, p_pad)
    p["s2"], p["b2"] = _make_bn(ks[3], planes, p_pad)
    p["c3"] = _make_conv(ks[4], cout, planes, 1, p_pad, cout)
    p["s3"], p["b3"] = _make_bn(ks[5], cout, cout)
    if stride != 1 or cin != cout:
        p["cd"] = _make_conv(ks[6], cout, cin, 1, cin_pad, cout)
        p["sd"], p["bd"] = _make_bn(ks[7], cout, cout)
    return p


def init_resnet101_params(key):
    params = {}
    key, k = jax.random.split(key)
    params["conv1"] = _make_conv(k, 64, 3, 7, 3, 128)
    key, k = jax.random.split(key)
    params["bn1_s"], params["bn1_b"] = _make_bn(k, 64, 128)
    # ResNet-101: Bottleneck blocks, layers = [3, 4, 23, 3], expansion 4.
    cfg = [("layer1", 64, 3, 1), ("layer2", 128, 4, 2),
           ("layer3", 256, 23, 2), ("layer4", 512, 3, 2)]
    inplanes, inplanes_pad = 64, 128
    for name, planes, blocks, stride in cfg:
        params[name] = []
        for b in range(blocks):
            key, k = jax.random.split(key)
            s = stride if b == 0 else 1
            params[name].append(
                _make_bottleneck(k, inplanes, inplanes_pad, planes, s))
            inplanes = planes * 4
            inplanes_pad = max(inplanes, 128)
    return params


# --------------------------------------------------------------- forward

def bottleneck_fused(x, p):
    N, H, W, Cin = x.shape
    M = N * H * W
    P = p["c1"]["cout"]
    Cout = p["c3"]["cout"]
    fn = _bottleneck_fn(M, H, W, Cin, P, Cout)
    out = fn(x.reshape(M, Cin),
             p["c1"]["wmat"], p["s1"], p["b1"],
             p["c2"]["wtap"], p["s2"], p["b2"],
             p["c3"]["wmat"], p["s3"], p["b3"])
    return out.reshape(N, H, W, Cout)


def bottleneck_unfused(x, p):
    identity = x
    out = conv_bn(x, p["c1"], p["s1"], p["b1"], stride=1, pad=0, relu=True)
    out = conv_bn(out, p["c2"], p["s2"], p["b2"],
                  stride=p["stride"], pad=1, relu=True)
    if "cd" in p:
        identity = conv_bn(x, p["cd"], p["sd"], p["bd"],
                           stride=p["stride"], pad=0, relu=False)
    # conv3 -> bn3 -> (+identity) -> relu, fused in one Pallas kernel.
    out = conv_bn(out, p["c3"], p["s3"], p["b3"],
                  stride=1, pad=0, relu=True, residual=identity)
    return out


def bottleneck_block(x, p):
    N, H, W, Cin = x.shape
    M = N * H * W
    fuse = (p["stride"] == 1 and "cd" not in p and M <= 256 and M % 8 == 0
            and Cin % 128 == 0 and p["c1"]["cout"] % 128 == 0
            and Cin == p["c3"]["cout"])
    if fuse:
        return bottleneck_fused(x, p)
    return bottleneck_unfused(x, p)


def resnet101_forward(x_nchw, params):
    x = jnp.transpose(x_nchw, (0, 2, 3, 1)).astype(jnp.bfloat16)  # -> NHWC bf16
    x = conv_bn(x, params["conv1"], params["bn1_s"], params["bn1_b"],
                stride=2, pad=3, relu=True)
    x = maxpool_3x3_s2(x)
    for name in ("layer1", "layer2", "layer3"):
        for blk in params[name]:
            x = bottleneck_block(x, blk)
    feature3 = x
    for blk in params["layer4"]:
        x = bottleneck_block(x, blk)
    feature4 = x
    tail = global_mean(feature4)                                  # (N, C, 1, 1)
    f3_nchw = jnp.transpose(feature3, (0, 3, 1, 2)).astype(jnp.float32)
    f4_nchw = jnp.transpose(feature4, (0, 3, 1, 2)).astype(jnp.float32)
    return f3_nchw, f4_nchw, tail


# ------------------------------------------------------------------ main

if __name__ == "__main__":
    key = jax.random.PRNGKey(0)
    kx, kp = jax.random.split(key)
    # NCHW input, as in PyTorch. 3 input channels required by resnet101 conv1.
    x = jax.random.normal(kx, (2, 3, 64, 64), jnp.float32)
    params = init_resnet101_params(kp)

    f3, f4, tail = resnet101_forward(x, params)
    jax.block_until_ready((f3, f4, tail))

    assert f3.shape == (2, 1024, 4, 4), f3.shape
    assert f4.shape == (2, 2048, 2, 2), f4.shape
    assert tail.shape == (2, 2048, 1, 1), tail.shape
    print("KERNEL_OK")
</pallas_src>

<mosaic_0001>
module attributes {stable_mosaic.version = 11 : i64} {
  func.func @_mm_bn_kernel(%arg0: i32, %arg1: i32, %arg2: i32, %arg3: memref<512x256xbf16, #tpu.memory_space<vmem>>, %arg4: memref<256x128xbf16, #tpu.memory_space<vmem>>, %arg5: memref<1x128xf32, #tpu.memory_space<vmem>>, %arg6: memref<1x128xf32, #tpu.memory_space<vmem>>, %arg7: memref<512x128xbf16, #tpu.memory_space<vmem>>, %arg8: memref<512x128xf32, #tpu.memory_space<vmem>>) attributes {dimension_semantics = [#tpu.dimension_semantics<parallel>, #tpu.dimension_semantics<parallel>, #tpu.dimension_semantics<arbitrary>], iteration_bounds = array<i64: 4, 1, 1>, scalar_prefetch = 0 : i64, scratch_operands = 1 : i64, tpu.core_type = #tpu.core_type<tc>, window_params = [{transform_indices = @transform_0, window_bounds = array<i64: 512, 256>}, {transform_indices = @transform_1, window_bounds = array<i64: 256, 128>}, {transform_indices = @transform_2, window_bounds = array<i64: 1, 128>}, {transform_indices = @transform_3, window_bounds = array<i64: 1, 128>}, {transform_indices = @transform_4, window_bounds = array<i64: 512, 128>}]} {
    %c0_i32 = arith.constant 0 : i32
    %0 = arith.cmpi eq, %arg2, %c0_i32 : i32
    %1 = arith.extui %0 : i1 to i32
    %c0_i32_0 = arith.constant 0 : i32
    %2 = arith.cmpi ne, %1, %c0_i32_0 : i32
    scf.if %2 {
      %cst_10 = arith.constant 0.000000e+00 : f32
      %12 = vector.broadcast %cst_10 : f32 to vector<512x128xf32>
      %c0_11 = arith.constant 0 : index
      %c0_12 = arith.constant 0 : index
      %13 = vector.load %arg8[%c0_11, %c0_12] : memref<512x128xf32, #tpu.memory_space<vmem>>, vector<512x128xf32>
      tpu.vector_store %arg8[%c0_11, %c0_12], %12 {strides = array<i32>} : memref<512x128xf32, #tpu.memory_space<vmem>>, vector<512x128xf32>,
    } else {
    }
    %c0 = arith.constant 0 : index
    %c0_1 = arith.constant 0 : index
    %3 = vector.load %arg8[%c0, %c0_1] : memref<512x128xf32, #tpu.memory_space<vmem>>, vector<512x128xf32>
    %c0_2 = arith.constant 0 : index
    %c0_3 = arith.constant 0 : index
    %4 = vector.load %arg3[%c0_2, %c0_3] : memref<512x256xbf16, #tpu.memory_space<vmem>>, vector<512x256xbf16>
    %c0_4 = arith.constant 0 : index
    %c0_5 = arith.constant 0 : index
    %5 = vector.load %arg4[%c0_4, %c0_5] : memref<256x128xbf16, #tpu.memory_space<vmem>>, vector<256x128xbf16>
    %cst = arith.constant dense<0.000000e+00> : vector<512x128xf32>
    %6 = tpu.matmul %4, %5, %cst {dimension_numbers = #tpu.dot_dimension_numbers<[1], [0], [0], [1], [0, 0, 1, 1], [], []>} : vector<512x256xbf16>, vector<256x128xbf16>, vector<512x128xf32> -> vector<512x128xf32>
    %7 = arith.addf %3, %6 : vector<512x128xf32>
    %c0_6 = arith.constant 0 : index
    %c0_7 = arith.constant 0 : index
    %8 = vector.load %arg8[%c0_6, %c0_7] : memref<512x128xf32, #tpu.memory_space<vmem>>, vector<512x128xf32>
    tpu.vector_store %arg8[%c0_6, %c0_7], %7 {strides = array<i32>} : memref<512x128xf32, #tpu.memory_space<vmem>>, vector<512x128xf32>,
    %c0_i32_8 = arith.constant 0 : i32
    %9 = arith.cmpi eq, %arg2, %c0_i32_8 : i32
    %10 = arith.extui %9 : i1 to i32
    %c0_i32_9 = arith.constant 0 : i32
    %11 = arith.cmpi ne, %10, %c0_i32_9 : i32
    scf.if %11 {
      %c0_10 = arith.constant 0 : index
      %c0_11 = arith.constant 0 : index
      %12 = vector.load %arg8[%c0_10, %c0_11] : memref<512x128xf32, #tpu.memory_space<vmem>>, vector<512x128xf32>
      %c0_12 = arith.constant 0 : index
      %c0_13 = arith.constant 0 : index
      %13 = vector.load %arg5[%c0_12, %c0_13] : memref<1x128xf32, #tpu.memory_space<vmem>>, vector<1x128xf32>
      %14 = vector.broadcast %13 : vector<1x128xf32> to vector<512x128xf32>
      %15 = arith.mulf %12, %14 : vector<512x128xf32>
      %c0_14 = arith.constant 0 : index
      %c0_15 = arith.constant 0 : index
      %16 = vector.load %arg6[%c0_14, %c0_15] : memref<1x128xf32, #tpu.memory_space<vmem>>, vector<1x128xf32>
      %17 = vector.broadcast %16 : vector<1x128xf32> to vector<512x128xf32>
      %18 = arith.addf %15, %17 : vector<512x128xf32>
      %cst_16 = arith.constant 0.000000e+00 : f32
      %19 = vector.broadcast %cst_16 : f32 to vector<512x128xf32>
      %20 = arith.maximumf %18, %19 : vector<512x128xf32>
      %21 = arith.truncf %20 : vector<512x128xf32> to vector<512x128xbf16>
      %c0_17 = arith.constant 0 : index
      %c0_18 = arith.constant 0 : index
      %22 = vector.load %arg7[%c0_17, %c0_18] : memref<512x128xbf16, #tpu.memory_space<vmem>>, vector<512x128xbf16>
      tpu.vector_store %arg7[%c0_17, %c0_18], %21 {strides = array<i32>} : memref<512x128xbf16, #tpu.memory_space<vmem>>, vector<512x128xbf16>,
    } else {
    }
    return
  }
  func.func @transform_0(%arg0: i32, %arg1: i32, %arg2: i32) -> (i32, i32) {
    %c0_i32 = arith.constant 0 : i32
    return %arg0, %arg2 : i32, i32
  }
  func.func @transform_1(%arg0: i32, %arg1: i32, %arg2: i32) -> (i32, i32) {
    %c0_i32 = arith.constant 0 : i32
    return %arg2, %arg1 : i32, i32
  }
  func.func @transform_2(%arg0: i32, %arg1: i32, %arg2: i32) -> (i32, i32) {
    %c0_i32 = arith.constant 0 : i32
    %c0_i32_0 = arith.constant 0 : i32
    return %c0_i32, %arg1 : i32, i32
  }
  func.func @transform_3(%arg0: i32, %arg1: i32, %arg2: i32) -> (i32, i32) {
    %c0_i32 = arith.constant 0 : i32
    %c0_i32_0 = arith.constant 0 : i32
    return %c0_i32, %arg1 : i32, i32
  }
  func.func @transform_4(%arg0: i32, %arg1: i32, %arg2: i32) -> (i32, i32) {
    %c0_i32 = arith.constant 0 : i32
    return %arg0, %arg1 : i32, i32
  }
}

</mosaic_0001>

<llo_original>
// kernel: tpu_custom_call.1
$region0: #{tpu_custom_call.1}
  #allocation0 [shape = 'u32[]', space=smem, size = 0x4, offset = 0x4, fixed_abs, tag = 'smem constant byte address 0x4 - core index']
  #allocation1 [shape = 'u32[72,128]{1,0:T(1,128)}', space=vmem, size = 0x9000, scoped, tag = 'internal scratch']
  #allocation2 [shape = 'f32[512,128]{1,0:T(8,128)}', space=vmem, size = 0x40000, scoped, tag = 'scratch operand']
  %s0 = inlined_call_operand.hbm [shape: bf16[2048,256], index: 0, kind: input, shape index: {}]
  %s1 = inlined_call_operand.hbm [shape: bf16[256,128], index: 1, kind: input, shape index: {}]
  %s2 = inlined_call_operand.vmem [shape: f32[1,128], index: 2, kind: input, shape index: {}]
  %s3 = inlined_call_operand.vmem [shape: f32[1,128], index: 3, kind: input, shape index: {}]
  %s4 = inlined_call_operand.hbm [shape: bf16[2048,128], index: 4, kind: output, shape index: {}]
  %s5 = sld [smem:[#allocation0]]
  $region65: #{tpu_custom_call.1} parent=0
    _
  %s7 = ssub.s32 1, %s5
  %s8 = scalar_select 0, %s7, %s5
  $region1: #{tpu_custom_call.1} parent=0
    #allocation3 [shape = 'u8[524288]{0}', space=vmem, size = 0x80000, scoped, tag = 'input window, operand 0']
    #allocation4 [shape = 's32[2]{0}', space=sflag, size = 0x8, scoped, tag = 'scoped memory for tpu_custom_call.1']
    #allocation5 [shape = 's32[2]{0}', space=sflag, size = 0x8, scoped, tag = 'scoped memory for tpu_custom_call.1']
    #allocation6 [shape = 'u8[65536]{0}', space=vmem, size = 0x10000, scoped, tag = 'input window, operand 1, single buffered']
    #allocation7 [shape = 's32[1]{0}', space=sflag, size = 0x4, scoped, tag = 'scoped memory for tpu_custom_call.1']
    #allocation8 [shape = 'u8[262144]{0}', space=vmem, size = 0x40000, scoped, tag = 'output window, operand 0']
    %9 = vsyncpa [#allocation4], 0
    %s10 = scalar_lea.sflag [#allocation4], 1
    %11 = vsyncpa %s10, 0
    %12 = vsyncpa [#allocation7], 0
    %13 = vsyncpa [#allocation5], 0
    %s14 = scalar_lea.sflag [#allocation5], 1
    %15 = vsyncpa %s14, 0
    loop: start=0, step=1, limit=6
    $region2: #{tpu_custom_call.1} parent=1 // loop_pre_header
      _
    $region3: #{tpu_custom_call.1} parent=1 // loop_header
      %s17 = sphi 0, %s21
      %p18 = scmp.ge.s32.totalorder %s17, 6
      %s24 = sphi 0, %s43
      %s25 = sphi 0, %s39
      %s26 = sphi 0, %s35
      %s27 = sphi 0, %s24
      %s28 = sphi 0, %s25
      %s29 = sphi 0, %s26
      %s30 = sphi 0, %s27
      %s31 = sphi 0, %s28
      %s32 = sphi 0, %s29
      %s48 = sphi 0, %s50
      %s51 = sphi 0, %s48
      %s52 = sphi 0, %s51
      %s68 = sphi 0, %s52
      %s76 = sphi 0, %s78
      %s79 = sphi 0, %s76
      %s80 = sphi 0, %s79
      %s96 = sphi 0, %s80
      %s102 = sphi 0, %s104
      %s105 = sphi 0, %s102
      %s106 = sphi 0, %s105
      %s122 = sphi 0, %s106
      %s128 = sphi 0, %s130
      %s131 = sphi 0, %s128
      %s132 = sphi 0, %s131
      %s148 = sphi 0, %s132
      %s156 = sphi 0, %s158
      %s159 = sphi 0, %s156
      %s160 = sphi 0, %s159
      %s176 = sphi 0, %s160
    $region4: #{tpu_custom_call.1} parent=1 // loop_header_branch
      %20 = sbr.rel (%p18) target = $region8
    $region5: #{tpu_custom_call.1} parent=1 // loop_body
      %s22 = ssub.s32 %s17, 1
      %s23 = ssub.s32 %s17, 2
      %s33 = sadd.s32 1, %s26
      %p34 = scmp.ge.s32.totalorder %s33, 1
      %s35 = scalar_select %p34, 0, %s33
      %s36 = sadd.s32 1, %s25
      %s37 = scalar_select %p34, %s36, %s25
      %p38 = scmp.ge.s32.totalorder %s37, 1
      %s39 = scalar_select %p38, 0, %s37
      %s40 = sadd.s32 1, %s24
      %s41 = scalar_select %p38, %s40, %s24
      %p42 = scmp.ge.s32.totalorder %s41, 4
      %s43 = scalar_select %p42, 0, %s41
      %s44 = ssub.s32 %s24, %s43
      %s45 = ssub.s32 %s26, %s35
      %s46 = sor.u32 %s44, %s45
      %p47 = scmp.eq.s32.totalorder %s46, 0
      %s49 = sadd.s32 %s48, 1
      %s50 = scalar_select %p47, %s48, %s49
      %p53 = pneg %p47
      %p54 = scmp.eq.s32.totalorder %s17, 3
      %p55 = por %p53, %p54
      %p56 = scmp.ne.s32.totalorder %s48, %s51
      %p57 = scmp.eq.s32.totalorder %s17, 0
      %p58 = por %p56, %p57
      %p59 = scmp.ne.s32.totalorder %s48, %s51
      %p60 = scmp.eq.s32.totalorder %s22, 3
      %p61 = por %p59, %p60
      %p62 = scmp.ne.s32.totalorder %s51, %s52
      %p63 = scmp.eq.s32.totalorder %s22, 0
      %p64 = por %p62, %p63
      %p65 = scmp.ne.s32.totalorder %s51, %s52
      %p66 = scmp.eq.s32.totalorder %s23, 3
      %p67 = por %p65, %p66
      %p69 = scmp.ne.s32.totalorder %s52, %s68
      %p70 = scmp.eq.s32.totalorder %s23, 0
      %p71 = por %p69, %p70
      %s72 = ssub.s32 %s26, %s35
      %s73 = ssub.s32 %s25, %s39
      %s74 = sor.u32 %s72, %s73
      %p75 = scmp.eq.s32.totalorder %s74, 0
      %s77 = sadd.s32 %s76, 1
      %s78 = scalar_select %p75, %s76, %s77
      %p81 = pneg %p75
      %p82 = scmp.eq.s32.totalorder %s17, 3
      %p83 = por %p81, %p82
      %p84 = scmp.ne.s32.totalorder %s76, %s79
      %p85 = scmp.eq.s32.totalorder %s17, 0
      %p86 = por %p84, %p85
      %p87 = scmp.ne.s32.totalorder %s76, %s79
      %p88 = scmp.eq.s32.totalorder %s22, 3
      %p89 = por %p87, %p88
      %p90 = scmp.ne.s32.totalorder %s79, %s80
      %p91 = scmp.eq.s32.totalorder %s22, 0
      %p92 = por %p90, %p91
      %p93 = scmp.ne.s32.totalorder %s79, %s80
      %p94 = scmp.eq.s32.totalorder %s23, 3
      %p95 = por %p93, %p94
      %p97 = scmp.ne.s32.totalorder %s80, %s96
      %p98 = scmp.eq.s32.totalorder %s23, 0
      %p99 = por %p97, %p98
      %s100 = ssub.s32 %s25, %s39
      %p101 = scmp.eq.s32.totalorder %s100, 0
      %s103 = sadd.s32 %s102, 1
      %s104 = scalar_select %p101, %s102, %s103
      %p107 = pneg %p101
      %p108 = scmp.eq.s32.totalorder %s17, 3
      %p109 = por %p107, %p108
      %p110 = scmp.ne.s32.totalorder %s102, %s105
      %p111 = scmp.eq.s32.totalorder %s17, 0
      %p112 = por %p110, %p111
      %p113 = scmp.ne.s32.totalorder %s102, %s105
      %p114 = scmp.eq.s32.totalorder %s22, 3
      %p115 = por %p113, %p114
      %p116 = scmp.ne.s32.totalorder %s105, %s106
      %p117 = scmp.eq.s32.totalorder %s22, 0
      %p118 = por %p116, %p117
      %p119 = scmp.ne.s32.totalorder %s105, %s106
      %p120 = scmp.eq.s32.totalorder %s23, 3
      %p121 = por %p119, %p120
      %p123 = scmp.ne.s32.totalorder %s106, %s122
      %p124 = scmp.eq.s32.totalorder %s23, 0
      %p125 = por %p123, %p124
      %s126 = ssub.s32 %s25, %s39
      %p127 = scmp.eq.s32.totalorder %s126, 0
      %s129 = sadd.s32 %s128, 1
      %s130 = scalar_select %p127, %s128, %s129
      %p133 = pneg %p127
      %p134 = scmp.eq.s32.totalorder %s17, 3
      %p135 = por %p133, %p134
      %p136 = scmp.ne.s32.totalorder %s128, %s131
      %p137 = scmp.eq.s32.totalorder %s17, 0
      %p138 = por %p136, %p137
      %p139 = scmp.ne.s32.totalorder %s128, %s131
      %p140 = scmp.eq.s32.totalorder %s22, 3
      %p141 = por %p139, %p140
      %p142 = scmp.ne.s32.totalorder %s131, %s132
      %p143 = scmp.eq.s32.totalorder %s22, 0
      %p144 = por %p142, %p143
      %p145 = scmp.ne.s32.totalorder %s131, %s132
      %p146 = scmp.eq.s32.totalorder %s23, 3
      %p147 = por %p145, %p146
      %p149 = scmp.ne.s32.totalorder %s132, %s148
      %p150 = scmp.eq.s32.totalorder %s23, 0
      %p151 = por %p149, %p150
      %s152 = ssub.s32 %s24, %s43
      %s153 = ssub.s32 %s25, %s39
      %s154 = sor.u32 %s152, %s153
      %p155 = scmp.eq.s32.totalorder %s154, 0
      %s157 = sadd.s32 %s156, 1
      %s158 = scalar_select %p155, %s156, %s157
      %p161 = pneg %p155
      %p162 = scmp.eq.s32.totalorder %s17, 3
      %p163 = por %p161, %p162
      %p164 = scmp.ne.s32.totalorder %s156, %s159
      %p165 = scmp.eq.s32.totalorder %s17, 0
      %p166 = por %p164, %p165
      %p167 = scmp.ne.s32.totalorder %s156, %s159
      %p168 = scmp.eq.s32.totalorder %s22, 3
      %p169 = por %p167, %p168
      %p170 = scmp.ne.s32.totalorder %s159, %s160
      %p171 = scmp.eq.s32.totalorder %s22, 0
      %p172 = por %p170, %p171
      %p173 = scmp.ne.s32.totalorder %s159, %s160
      %p174 = scmp.eq.s32.totalorder %s23, 3
      %p175 = por %p173, %p174
      %p177 = scmp.ne.s32.totalorder %s160, %s176
      %p178 = scmp.eq.s32.totalorder %s23, 0
      %p179 = por %p177, %p178
      %p180 = scmp.le.s32.totalorder 1, %s17
      %p181 = scmp.lt.s32.totalorder %s17, 5
      %p182 = pnand %p180, %p181
      %p183 = pneg %p182
      // Predicated region
      $region9: #{tpu_custom_call.1} parent=5 // pred_check
        _
      $region10: #{tpu_custom_call.1} parent=5 // pred_check_branch
        %185 = sbr.rel (%p182) target = $region12
      $region11: #{tpu_custom_call.1} parent=5 // pred_region
        %s186 = ssub.s32 %s17, 1
        // Predicated region
        $region13: #{tpu_custom_call.1} parent=11 // pred_check
          %p187 = pneg %p92
        $region14: #{tpu_custom_call.1} parent=11 // pred_check_branch
          %189 = sbr.rel (%p187) target = $region16
        $region15: #{tpu_custom_call.1} parent=11 // pred_region
          %s190 = smul.u32 32, %s29
          %192 = vsyncadd [#allocation7], 0
          %s193 = sadd.s32 %s28, %s190
          %s194 = smul.addr %s193, 4
          %s195 = scalar_lea.hbm %s1, %s194
          %s196 = sshll.u32 %s195, 4
          %s197 = int_to_ptr.hbm [resolvable:$true] %s196
          %s198 = sshll.u32 [#allocation6], 4
          %s199 = int_to_ptr.vmem [resolvable:$true] %s198
          %204 = dma.hbm_to_vmem [thread:$0]  %s197, 2048, %s199, [#allocation7], 64, 64, 4
        $region16: #{tpu_custom_call.1} parent=11 // pred_fallthru
          _
        // Predicated region
        $region17: #{tpu_custom_call.1} parent=11 // pred_check
          %p205 = pneg %p118
        $region18: #{tpu_custom_call.1} parent=11 // pred_check_branch
          %207 = sbr.rel (%p205) target = $region20
        $region19: #{tpu_custom_call.1} parent=11 // pred_region
          %p208 = scmp.lt.s32.totalorder %s28, 0
          %s209 = scalar_select %p208, %s28, 0
          %s210 = scalar_lea.vmem %s2, %s209
        $region20: #{tpu_custom_call.1} parent=11 // pred_fallthru
          _
        // Predicated region
        $region21: #{tpu_custom_call.1} parent=11 // pred_check
          %p211 = pneg %p144
        $region22: #{tpu_custom_call.1} parent=11 // pred_check_branch
          %213 = sbr.rel (%p211) target = $region24
        $region23: #{tpu_custom_call.1} parent=11 // pred_region
          %p214 = scmp.lt.s32.totalorder %s28, 0
          %s215 = scalar_select %p214, %s28, 0
          %s216 = scalar_lea.vmem %s3, %s215
        $region24: #{tpu_custom_call.1} parent=11 // pred_fallthru
          _
      $region12: #{tpu_custom_call.1} parent=5 // pred_fallthru
        _
      %p217 = scmp.lt.s32.totalorder %s17, 4
      // Predicated region
      $region25: #{tpu_custom_call.1} parent=5 // pred_check
        %p218 = pneg %p217
      $region26: #{tpu_custom_call.1} parent=5 // pred_check_branch
        %220 = sbr.rel (%p218) target = $region28
      $region27: #{tpu_custom_call.1} parent=5 // pred_region
        // Predicated region
        $region29: #{tpu_custom_call.1} parent=27 // pred_check
          %p221 = pneg %p58
        $region30: #{tpu_custom_call.1} parent=27 // pred_check_branch
          %223 = sbr.rel (%p221) target = $region32
        $region31: #{tpu_custom_call.1} parent=27 // pred_region
          %s224 = sand.u32 %s48, 1
          %s225 = scalar_lea.sflag [#allocation4], %s224
          %s226 = sand.u32 %s48, 1
          %s227 = smul.addr %s226, 512
          %s228 = scalar_lea.vmem [#allocation3], %s227
          %s229 = smul.u32 64, %s24
          %s230 = smul.u32 2, %s26
          %232 = vsyncadd %s225, 0
          %s233 = smul.addr %s229, 2
          %s234 = sadd.s32 %s230, %s233
          %s235 = smul.addr %s234, 4
          %s236 = scalar_lea.hbm %s0, %s235
          %s237 = sshll.u32 %s236, 4
          %s238 = int_to_ptr.hbm [resolvable:$true] %s237
          %s239 = sshll.u32 %s228, 4
          %s240 = int_to_ptr.vmem [resolvable:$true] %s239
          %245 = dma.hbm_to_vmem [thread:$0]  %s238, 8192, %s240, %s225, 128, 128, 8
        $region32: #{tpu_custom_call.1} parent=27 // pred_fallthru
          _
      $region28: #{tpu_custom_call.1} parent=5 // pred_fallthru
        _
      %p246 = scmp.le.s32.totalorder 1, %s17
      %p247 = scmp.lt.s32.totalorder %s17, 5
      %p248 = pnand %p246, %p247
      %p249 = pneg %p248
      // Predicated region
      $region33: #{tpu_custom_call.1} parent=5 // pred_check
        _
      $region34: #{tpu_custom_call.1} parent=5 // pred_check_branch
        %251 = sbr.rel (%p248) target = $region36
      $region35: #{tpu_custom_call.1} parent=5 // pred_region
        %s252 = ssub.s32 %s17, 1
        %s253 = sand.u32 %s51, 1
        %s254 = scalar_lea.sflag [#allocation4], %s253
        %s255 = sand.u32 %s51, 1
        %s256 = smul.addr %s255, 512
        %s257 = scalar_lea.vmem [#allocation3], %s256
        // Predicated region
        $region37: #{tpu_custom_call.1} parent=35 // pred_check
          %p258 = pneg %p64
        $region38: #{tpu_custom_call.1} parent=35 // pred_check_branch
          %260 = sbr.rel (%p258) target = $region40
        $region39: #{tpu_custom_call.1} parent=35 // pred_region
          %262 = dma.done %s254, 8192
        $region40: #{tpu_custom_call.1} parent=35 // pred_fallthru
          _
        // Predicated region
        $region41: #{tpu_custom_call.1} parent=35 // pred_check
          %p263 = pneg %p92
        $region42: #{tpu_custom_call.1} parent=35 // pred_check_branch
          %265 = sbr.rel (%p263) target = $region44
        $region43: #{tpu_custom_call.1} parent=35 // pred_region
          %267 = dma.done [#allocation7], 2048
        $region44: #{tpu_custom_call.1} parent=35 // pred_fallthru
          _
        %s268 = sand.u32 %s51, 1
        %s269 = scalar_lea.sflag [#allocation4], %s268
        %s270 = sand.u32 %s51, 1
        %s271 = smul.addr %s270, 512
        %s272 = scalar_lea.vmem [#allocation3], %s271
        %p273 = pneg %p64
        %p274 = pneg %p61
        %p275 = pneg %p92
        %p276 = pneg %p89
        %p277 = scmp.lt.s32.totalorder %s28, 0
        %s278 = scalar_select %p277, %s28, 0
        %s279 = scalar_lea.vmem %s2, %s278
        %p280 = pneg %p118
        %p281 = pneg %p115
        %p282 = scmp.lt.s32.totalorder %s28, 0
        %s283 = scalar_select %p282, %s28, 0
        %s284 = scalar_lea.vmem %s3, %s283
        %p285 = pneg %p144
        %p286 = pneg %p141
        %p287 = pneg %p172
        %p288 = pneg %p169
        %s289 = sand.u32 %s159, 1
        %s290 = scalar_lea.sflag [#allocation5], %s289
        %s291 = sand.u32 %s159, 1
        %s292 = smul.addr %s291, 256
        %s293 = scalar_lea.vmem [#allocation8], %s292
        %s294 = smul.u32 64, %s27
        %s295 = smul.u32 2, %s29
        %s296 = smul.u32 32, %s29
        %p297 = scmp.lt.s32.totalorder %s28, 0
        %s298 = scalar_select %p297, %s28, 0
        %s299 = scalar_lea.vmem %s2, %s298
        %p300 = scmp.lt.s32.totalorder %s28, 0
        %s301 = scalar_select %p300, %s28, 0
        %s302 = scalar_lea.vmem %s3, %s301
        %s303 = smul.u32 64, %s27
        %p304 = scmp.eq.s32.totalorder %s29, 0
        // Predicated region
        $region45: #{tpu_custom_call.1} parent=35 // pred_check
          %p305 = pneg %p304
        $region46: #{tpu_custom_call.1} parent=35 // pred_check_branch
          %307 = sbr.rel (%p305) target = $region48
        $region47: #{tpu_custom_call.1} parent=35 // pred_region
          %308 = vst [vmem:[#allocation2] sm:$0xff] 0.0
          %309 = vst [vmem:[#allocation2 + $0x8] sm:$0xff] 0.0
          %310 = vst [vmem:[#allocation2 + $0x10] sm:$0xff] 0.0
          %311 = vst [vmem:[#allocation2 + $0x18] sm:$0xff] 0.0
          %312 = vst [vmem:[#allocation2 + $0x20] sm:$0xff] 0.0
          %313 = vst [vmem:[#allocation2 + $0x28] sm:$0xff] 0.0
          %314 = vst [vmem:[#allocation2 + $0x30] sm:$0xff] 0.0
          %315 = vst [vmem:[#allocation2 + $0x38] sm:$0xff] 0.0
          %316 = vst [vmem:[#allocation2 + $0x40] sm:$0xff] 0.0
          %317 = vst [vmem:[#allocation2 + $0x48] sm:$0xff] 0.0
          %318 = vst [vmem:[#allocation2 + $0x50] sm:$0xff] 0.0
          %319 = vst [vmem:[#allocation2 + $0x58] sm:$0xff] 0.0
          %320 = vst [vmem:[#allocation2 + $0x60] sm:$0xff] 0.0
          %321 = vst [vmem:[#allocation2 + $0x68] sm:$0xff] 0.0
          %322 = vst [vmem:[#allocation2 + $0x70] sm:$0xff] 0.0
          %323 = vst [vmem:[#allocation2 + $0x78] sm:$0xff] 0.0
          %324 = vst [vmem:[#allocation2 + $0x80] sm:$0xff] 0.0
          %325 = vst [vmem:[#allocation2 + $0x88] sm:$0xff] 0.0
          %326 = vst [vmem:[#allocation2 + $0x90] sm:$0xff] 0.0
          %327 = vst [vmem:[#allocation2 + $0x98] sm:$0xff] 0.0
          %328 = vst [vmem:[#allocation2 + $0xa0] sm:$0xff] 0.0
          %329 = vst [vmem:[#allocation2 + $0xa8] sm:$0xff] 0.0
          %330 = vst [vmem:[#allocation2 + $0xb0] sm:$0xff] 0.0
          %331 = vst [vmem:[#allocation2 + $0xb8] sm:$0xff] 0.0
          %332 = vst [vmem:[#allocation2 + $0xc0] sm:$0xff] 0.0
          %333 = vst [vmem:[#allocation2 + $0xc8] sm:$0xff] 0.0
          %334 = vst [vmem:[#allocation2 + $0xd0] sm:$0xff] 0.0
          %335 = vst [vmem:[#allocation2 + $0xd8] sm:$0xff] 0.0
          %336 = vst [vmem:[#allocation2 + $0xe0] sm:$0xff] 0.0
          %337 = vst [vmem:[#allocation2 + $0xe8] sm:$0xff] 0.0
          %338 = vst [vmem:[#allocation2 + $0xf0] sm:$0xff] 0.0
          %339 = vst [vmem:[#allocation2 + $0xf8] sm:$0xff] 0.0
          %340 = vst [vmem:[#allocation2 + $0x100] sm:$0xff] 0.0
          %341 = vst [vmem:[#allocation2 + $0x108] sm:$0xff] 0.0
          %342 = vst [vmem:[#allocation2 + $0x110] sm:$0xff] 0.0
          %343 = vst [vmem:[#allocation2 + $0x118] sm:$0xff] 0.0
          %344 = vst [vmem:[#allocation2 + $0x120] sm:$0xff] 0.0
          %345 = vst [vmem:[#allocation2 + $0x128] sm:$0xff] 0.0
          %346 = vst [vmem:[#allocation2 + $0x130] sm:$0xff] 0.0
          %347 = vst [vmem:[#allocation2 + $0x138] sm:$0xff] 0.0
          %348 = vst [vmem:[#allocation2 + $0x140] sm:$0xff] 0.0
          %349 = vst [vmem:[#allocation2 + $0x148] sm:$0xff] 0.0
          %350 = vst [vmem:[#allocation2 + $0x150] sm:$0xff] 0.0
          %351 = vst [vmem:[#allocation2 + $0x158] sm:$0xff] 0.0
          %352 = vst [vmem:[#allocation2 + $0x160] sm:$0xff] 0.0
          %353 = vst [vmem:[#allocation2 + $0x168] sm:$0xff] 0.0
          %354 = vst [vmem:[#allocation2 + $0x170] sm:$0xff] 0.0
          %355 = vst [vmem:[#allocation2 + $0x178] sm:$0xff] 0.0
          %356 = vst [vmem:[#allocation2 + $0x180] sm:$0xff] 0.0
          %357 = vst [vmem:[#allocation2 + $0x188] sm:$0xff] 0.0
          %358 = vst [vmem:[#allocation2 + $0x190] sm:$0xff] 0.0
          %359 = vst [vmem:[#allocation2 + $0x198] sm:$0xff] 0.0
          %360 = vst [vmem:[#allocation2 + $0x1a0] sm:$0xff] 0.0
          %361 = vst [vmem:[#allocation2 + $0x1a8] sm:$0xff] 0.0
          %362 = vst [vmem:[#allocation2 + $0x1b0] sm:$0xff] 0.0
          %363 = vst [vmem:[#allocation2 + $0x1b8] sm:$0xff] 0.0
          %364 = vst [vmem:[#allocation2 + $0x1c0] sm:$0xff] 0.0
          %365 = vst [vmem:[#allocation2 + $0x1c8] sm:$0xff] 0.0
          %366 = vst [vmem:[#allocation2 + $0x1d0] sm:$0xff] 0.0
          %367 = vst [vmem:[#allocation2 + $0x1d8] sm:$0xff] 0.0
          %368 = vst [vmem:[#allocation2 + $0x1e0] sm:$0xff] 0.0
          %369 = vst [vmem:[#allocation2 + $0x1e8] sm:$0xff] 0.0
          %370 = vst [vmem:[#allocation2 + $0x1f0] sm:$0xff] 0.0
          %371 = vst [vmem:[#allocation2 + $0x1f8] sm:$0xff] 0.0
        $region48: #{tpu_custom_call.1} parent=35 // pred_fallthru
          _
        %v372 = vld [vmem:[#allocation2] sm:$0xff]
        %v373 = vld [vmem:[#allocation2 + $0x8] sm:$0xff]
        %v374 = vld [vmem:[#allocation2 + $0x10] sm:$0xff]
        %v375 = vld [vmem:[#allocation2 + $0x18] sm:$0xff]
        %v376 = vld [vmem:[#allocation2 + $0x20] sm:$0xff]
        %v377 = vld [vmem:[#allocation2 + $0x28] sm:$0xff]
        %v378 = vld [vmem:[#allocation2 + $0x30] sm:$0xff]
        %v379 = vld [vmem:[#allocation2 + $0x38] sm:$0xff]
        %v380 = vld [vmem:[#allocation2 + $0x40] sm:$0xff]
        %v381 = vld [vmem:[#allocation2 + $0x48] sm:$0xff]
        %v382 = vld [vmem:[#allocation2 + $0x50] sm:$0xff]
        %v383 = vld [vmem:[#allocation2 + $0x58] sm:$0xff]
        %v384 = vld [vmem:[#allocation2 + $0x60] sm:$0xff]
        %v385 = vld [vmem:[#allocation2 + $0x68] sm:$0xff]
        %v386 = vld [vmem:[#allocation2 + $0x70] sm:$0xff]
        %v387 = vld [vmem:[#allocation2 + $0x78] sm:$0xff]
        %v388 = vld [vmem:[#allocation2 + $0x80] sm:$0xff]
        %v389 = vld [vmem:[#allocation2 + $0x88] sm:$0xff]
        %v390 = vld [vmem:[#allocation2 + $0x90] sm:$0xff]
        %v391 = vld [vmem:[#allocation2 + $0x98] sm:$0xff]
        %v392 = vld [vmem:[#allocation2 + $0xa0] sm:$0xff]
        %v393 = vld [vmem:[#allocation2 + $0xa8] sm:$0xff]
        %v394 = vld [vmem:[#allocation2 + $0xb0] sm:$0xff]
        %v395 = vld [vmem:[#allocation2 + $0xb8] sm:$0xff]
        %v396 = vld [vmem:[#allocation2 + $0xc0] sm:$0xff]
        %v397 = vld [vmem:[#allocation2 + $0xc8] sm:$0xff]
        %v398 = vld [vmem:[#allocation2 + $0xd0] sm:$0xff]
        %v399 = vld [vmem:[#allocation2 + $0xd8] sm:$0xff]
        %v400 = vld [vmem:[#allocation2 + $0xe0] sm:$0xff]
        %v401 = vld [vmem:[#allocation2 + $0xe8] sm:$0xff]
        %v402 = vld [vmem:[#allocation2 + $0xf0] sm:$0xff]
        %v403 = vld [vmem:[#allocation2 + $0xf8] sm:$0xff]
        %v404 = vld [vmem:[#allocation2 + $0x100] sm:$0xff]
        %v405 = vld [vmem:[#allocation2 + $0x108] sm:$0xff]
        %v406 = vld [vmem:[#allocation2 + $0x110] sm:$0xff]
        %v407 = vld [vmem:[#allocation2 + $0x118] sm:$0xff]
        %v408 = vld [vmem:[#allocation2 + $0x120] sm:$0xff]
        %v409 = vld [vmem:[#allocation2 + $0x128] sm:$0xff]
        %v410 = vld [vmem:[#allocation2 + $0x130] sm:$0xff]
        %v411 = vld [vmem:[#allocation2 + $0x138] sm:$0xff]
        %v412 = vld [vmem:[#allocation2 + $0x140] sm:$0xff]
        %v413 = vld [vmem:[#allocation2 + $0x148] sm:$0xff]
        %v414 = vld [vmem:[#allocation2 + $0x150] sm:$0xff]
        %v415 = vld [vmem:[#allocation2 + $0x158] sm:$0xff]
        %v416 = vld [vmem:[#allocation2 + $0x160] sm:$0xff]
        %v417 = vld [vmem:[#allocation2 + $0x168] sm:$0xff]
        %v418 = vld [vmem:[#allocation2 + $0x170] sm:$0xff]
        %v419 = vld [vmem:[#allocation2 + $0x178] sm:$0xff]
        %v420 = vld [vmem:[#allocation2 + $0x180] sm:$0xff]
        %v421 = vld [vmem:[#allocation2 + $0x188] sm:$0xff]
        %v422 = vld [vmem:[#allocation2 + $0x190] sm:$0xff]
        %v423 = vld [vmem:[#allocation2 + $0x198] sm:$0xff]
        %v424 = vld [vmem:[#allocation2 + $0x1a0] sm:$0xff]
        %v425 = vld [vmem:[#allocation2 + $0x1a8] sm:$0xff]
        %v426 = vld [vmem:[#allocation2 + $0x1b0] sm:$0xff]
        %v427 = vld [vmem:[#allocation2 + $0x1b8] sm:$0xff]
        %v428 = vld [vmem:[#allocation2 + $0x1c0] sm:$0xff]
        %v429 = vld [vmem:[#allocation2 + $0x1c8] sm:$0xff]
        %v430 = vld [vmem:[#allocation2 + $0x1d0] sm:$0xff]
        %v431 = vld [vmem:[#allocation2 + $0x1d8] sm:$0xff]
        %v432 = vld [vmem:[#allocation2 + $0x1e0] sm:$0xff]
        %v433 = vld [vmem:[#allocation2 + $0x1e8] sm:$0xff]
        %v434 = vld [vmem:[#allocation2 + $0x1f0] sm:$0xff]
        %v435 = vld [vmem:[#allocation2 + $0x1f8] sm:$0xff]
        %v436 = vld [vmem:[%s257] sm:$0xff]
        %v437 = vld [vmem:[%s257 + $0x8] sm:$0xff]
        %v438 = vld [vmem:[%s257 + $0x10] sm:$0xff]
        %v439 = vld [vmem:[%s257 + $0x18] sm:$0xff]
        %v440 = vld [vmem:[%s257 + $0x20] sm:$0xff]
        %v441 = vld [vmem:[%s257 + $0x28] sm:$0xff]
        %v442 = vld [vmem:[%s257 + $0x30] sm:$0xff]
        %v443 = vld [vmem:[%s257 + $0x38] sm:$0xff]
        %v444 = vld [vmem:[%s257 + $0x40] sm:$0xff]
        %v445 = vld [vmem:[%s257 + $0x48] sm:$0xff]
        %v446 = vld [vmem:[%s257 + $0x50] sm:$0xff]
        %v447 = vld [vmem:[%s257 + $0x58] sm:$0xff]
        %v448 = vld [vmem:[%s257 + $0x60] sm:$0xff]
        %v449 = vld [vmem:[%s257 + $0x68] sm:$0xff]
        %v450 = vld [vmem:[%s257 + $0x70] sm:$0xff]
        %v451 = vld [vmem:[%s257 + $0x78] sm:$0xff]
        %v452 = vld [vmem:[%s257 + $0x80] sm:$0xff]
        %v453 = vld [vmem:[%s257 + $0x88] sm:$0xff]
        %v454 = vld [vmem:[%s257 + $0x90] sm:$0xff]
        %v455 = vld [vmem:[%s257 + $0x98] sm:$0xff]
        %v456 = vld [vmem:[%s257 + $0xa0] sm:$0xff]
        %v457 = vld [vmem:[%s257 + $0xa8] sm:$0xff]
        %v458 = vld [vmem:[%s257 + $0xb0] sm:$0xff]
        %v459 = vld [vmem:[%s257 + $0xb8] sm:$0xff]
        %v460 = vld [vmem:[%s257 + $0xc0] sm:$0xff]
        %v461 = vld [vmem:[%s257 + $0xc8] sm:$0xff]
        %v462 = vld [vmem:[%s257 + $0xd0] sm:$0xff]
        %v463 = vld [vmem:[%s257 + $0xd8] sm:$0xff]
        %v464 = vld [vmem:[%s257 + $0xe0] sm:$0xff]
        %v465 = vld [vmem:[%s257 + $0xe8] sm:$0xff]
        %v466 = vld [vmem:[%s257 + $0xf0] sm:$0xff]
        %v467 = vld [vmem:[%s257 + $0xf8] sm:$0xff]
        %v468 = vld [vmem:[%s257 + $0x100] sm:$0xff]
        %v469 = vld [vmem:[%s257 + $0x108] sm:$0xff]
        %v470 = vld [vmem:[%s257 + $0x110] sm:$0xff]
        %v471 = vld [vmem:[%s257 + $0x118] sm:$0xff]
        %v472 = vld [vmem:[%s257 + $0x120] sm:$0xff]
        %v473 = vld [vmem:[%s257 + $0x128] sm:$0xff]
        %v474 = vld [vmem:[%s257 + $0x130] sm:$0xff]
        %v475 = vld [vmem:[%s257 + $0x138] sm:$0xff]
        %v476 = vld [vmem:[%s257 + $0x140] sm:$0xff]
        %v477 = vld [vmem:[%s257 + $0x148] sm:$0xff]
        %v478 = vld [vmem:[%s257 + $0x150] sm:$0xff]
        %v479 = vld [vmem:[%s257 + $0x158] sm:$0xff]
        %v480 = vld [vmem:[%s257 + $0x160] sm:$0xff]
        %v481 = vld [vmem:[%s257 + $0x168] sm:$0xff]
        %v482 = vld [vmem:[%s257 + $0x170] sm:$0xff]
        %v483 = vld [vmem:[%s257 + $0x178] sm:$0xff]
        %v484 = vld [vmem:[%s257 + $0x180] sm:$0xff]
        %v485 = vld [vmem:[%s257 + $0x188] sm:$0xff]
        %v486 = vld [vmem:[%s257 + $0x190] sm:$0xff]
        %v487 = vld [vmem:[%s257 + $0x198] sm:$0xff]
        %v488 = vld [vmem:[%s257 + $0x1a0] sm:$0xff]
        %v489 = vld [vmem:[%s257 + $0x1a8] sm:$0xff]
        %v490 = vld [vmem:[%s257 + $0x1b0] sm:$0xff]
        %v491 = vld [vmem:[%s257 + $0x1b8] sm:$0xff]
        %v492 = vld [vmem:[%s257 + $0x1c0] sm:$0xff]
        %v493 = vld [vmem:[%s257 + $0x1c8] sm:$0xff]
        %v494 = vld [vmem:[%s257 + $0x1d0] sm:$0xff]
        %v495 = vld [vmem:[%s257 + $0x1d8] sm:$0xff]
        %v496 = vld [vmem:[%s257 + $0x1e0] sm:$0xff]
        %v497 = vld [vmem:[%s257 + $0x1e8] sm:$0xff]
        %v498 = vld [vmem:[%s257 + $0x1f0] sm:$0xff]
        %v499 = vld [vmem:[%s257 + $0x1f8] sm:$0xff]
        %v500 = vld [vmem:[#allocation6] sm:$0xf]
        %v501 = vld [vmem:[#allocation6 + $0x4] sm:$0xf]
        %v502 = vld [vmem:[#allocation6 + $0x8] sm:$0xf]
        %v503 = vld [vmem:[#allocation6 + $0xc] sm:$0xf]
        %v504 = vld [vmem:[#allocation6 + $0x10] sm:$0xf]
        %v505 = vld [vmem:[#allocation6 + $0x14] sm:$0xf]
        %v506 = vld [vmem:[#allocation6 + $0x18] sm:$0xf]
        %v507 = vld [vmem:[#allocation6 + $0x1c] sm:$0xf]
        %v508 = vld [vmem:[#allocation6 + $0x20] sm:$0xf]
        %v509 = vld [vmem:[#allocation6 + $0x24] sm:$0xf]
        %v510 = vld [vmem:[#allocation6 + $0x28] sm:$0xf]
        %v511 = vld [vmem:[#allocation6 + $0x2c] sm:$0xf]
        %v512 = vld [vmem:[#allocation6 + $0x30] sm:$0xf]
        %v513 = vld [vmem:[#allocation6 + $0x34] sm:$0xf]
        %v514 = vld [vmem:[#allocation6 + $0x38] sm:$0xf]
        %v515 = vld [vmem:[#allocation6 + $0x3c] sm:$0xf]
        %v516 = vld [vmem:[#allocation6 + $0x40] sm:$0xf]
        %v517 = vld [vmem:[#allocation6 + $0x44] sm:$0xf]
        %v518 = vld [vmem:[#allocation6 + $0x48] sm:$0xf]
        %v519 = vld [vmem:[#allocation6 + $0x4c] sm:$0xf]
        %v520 = vld [vmem:[#allocation6 + $0x50] sm:$0xf]
        %v521 = vld [vmem:[#allocation6 + $0x54] sm:$0xf]
        %v522 = vld [vmem:[#allocation6 + $0x58] sm:$0xf]
        %v523 = vld [vmem:[#allocation6 + $0x5c] sm:$0xf]
        %v524 = vld [vmem:[#allocation6 + $0x60] sm:$0xf]
        %v525 = vld [vmem:[#allocation6 + $0x64] sm:$0xf]
        %v526 = vld [vmem:[#allocation6 + $0x68] sm:$0xf]
        %v527 = vld [vmem:[#allocation6 + $0x6c] sm:$0xf]
        %v528 = vld [vmem:[#allocation6 + $0x70] sm:$0xf]
        %v529 = vld [vmem:[#allocation6 + $0x74] sm:$0xf]
        %v530 = vld [vmem:[#allocation6 + $0x78] sm:$0xf]
        %v531 = vld [vmem:[#allocation6 + $0x7c] sm:$0xf]
        %v596 = vunpack.c.l.b16 %v436
        %v597 = vunpack.c.h.b16 %v436
        %v598 = vunpack.c.l.b16 %v437
        %v599 = vunpack.c.h.b16 %v437
        %v600 = vunpack.c.l.b16 %v438
        %v601 = vunpack.c.h.b16 %v438
        %v602 = vunpack.c.l.b16 %v439
        %v603 = vunpack.c.h.b16 %v439
        %v604 = vunpack.c.l.b16 %v440
        %v605 = vunpack.c.h.b16 %v440
        %v606 = vunpack.c.l.b16 %v441
        %v607 = vunpack.c.h.b16 %v441
        %v608 = vunpack.c.l.b16 %v442
        %v609 = vunpack.c.h.b16 %v442
        %v610 = vunpack.c.l.b16 %v443
        %v611 = vunpack.c.h.b16 %v443
        %v612 = vunpack.c.l.b16 %v444
        %v613 = vunpack.c.h.b16 %v444
        %v614 = vunpack.c.l.b16 %v445
        %v615 = vunpack.c.h.b16 %v445
        %v616 = vunpack.c.l.b16 %v446
        %v617 = vunpack.c.h.b16 %v446
        %v618 = vunpack.c.l.b16 %v447
        %v619 = vunpack.c.h.b16 %v447
        %v620 = vunpack.c.l.b16 %v448
        %v621 = vunpack.c.h.b16 %v448
        %v622 = vunpack.c.l.b16 %v449
        %v623 = vunpack.c.h.b16 %v449
        %v624 = vunpack.c.l.b16 %v450
        %v625 = vunpack.c.h.b16 %v450
        %v626 = vunpack.c.l.b16 %v451
        %v627 = vunpack.c.h.b16 %v451
        %v628 = vunpack.c.l.b16 %v452
        %v629 = vunpack.c.h.b16 %v452
        %v630 = vunpack.c.l.b16 %v453
        %v631 = vunpack.c.h.b16 %v453
        %v632 = vunpack.c.l.b16 %v454
        %v633 = vunpack.c.h.b16 %v454
        %v634 = vunpack.c.l.b16 %v455
        %v635 = vunpack.c.h.b16 %v455
        %v636 = vunpack.c.l.b16 %v456
        %v637 = vunpack.c.h.b16 %v456
        %v638 = vunpack.c.l.b16 %v457
        %v639 = vunpack.c.h.b16 %v457
        %v640 = vunpack.c.l.b16 %v458
        %v641 = vunpack.c.h.b16 %v458
        %v642 = vunpack.c.l.b16 %v459
        %v643 = vunpack.c.h.b16 %v459
        %v644 = vunpack.c.l.b16 %v460
        %v645 = vunpack.c.h.b16 %v460
        %v646 = vunpack.c.l.b16 %v461
        %v647 = vunpack.c.h.b16 %v461
        %v648 = vunpack.c.l.b16 %v462
        %v649 = vunpack.c.h.b16 %v462
        %v650 = vunpack.c.l.b16 %v463
        %v651 = vunpack.c.h.b16 %v463
        %v652 = vunpack.c.l.b16 %v464
        %v653 = vunpack.c.h.b16 %v464
        %v654 = vunpack.c.l.b16 %v465
        %v655 = vunpack.c.h.b16 %v465
        %v656 = vunpack.c.l.b16 %v466
        %v657 = vunpack.c.h.b16 %v466
        %v658 = vunpack.c.l.b16 %v467
        %v659 = vunpack.c.h.b16 %v467
        %v660 = vunpack.c.l.b16 %v468
        %v661 = vunpack.c.h.b16 %v468
        %v662 = vunpack.c.l.b16 %v469
        %v663 = vunpack.c.h.b16 %v469
        %v664 = vunpack.c.l.b16 %v470
        %v665 = vunpack.c.h.b16 %v470
        %v666 = vunpack.c.l.b16 %v471
        %v667 = vunpack.c.h.b16 %v471
        %v668 = vunpack.c.l.b16 %v472
        %v669 = vunpack.c.h.b16 %v472
        %v670 = vunpack.c.l.b16 %v473
        %v671 = vunpack.c.h.b16 %v473
        %v672 = vunpack.c.l.b16 %v474
        %v673 = vunpack.c.h.b16 %v474
        %v674 = vunpack.c.l.b16 %v475
        %v675 = vunpack.c.h.b16 %v475
        %v676 = vunpack.c.l.b16 %v476
        %v677 = vunpack.c.h.b16 %v476
        %v678 = vunpack.c.l.b16 %v477
        %v679 = vunpack.c.h.b16 %v477
        %v680 = vunpack.c.l.b16 %v478
        %v681 = vunpack.c.h.b16 %v478
        %v682 = vunpack.c.l.b16 %v479
        %v683 = vunpack.c.h.b16 %v479
        %v684 = vunpack.c.l.b16 %v480
        %v685 = vunpack.c.h.b16 %v480
        %v686 = vunpack.c.l.b16 %v481
        %v687 = vunpack.c.h.b16 %v481
        %v688 = vunpack.c.l.b16 %v482
        %v689 = vunpack.c.h.b16 %v482
        %v690 = vunpack.c.l.b16 %v483
        %v691 = vunpack.c.h.b16 %v483
        %v692 = vunpack.c.l.b16 %v484
        %v693 = vunpack.c.h.b16 %v484
        %v694 = vunpack.c.l.b16 %v485
        %v695 = vunpack.c.h.b16 %v485
        %v696 = vunpack.c.l.b16 %v486
        %v697 = vunpack.c.h.b16 %v486
        %v698 = vunpack.c.l.b16 %v487
        %v699 = vunpack.c.h.b16 %v487
        %v700 = vunpack.c.l.b16 %v488
        %v701 = vunpack.c.h.b16 %v488
        %v702 = vunpack.c.l.b16 %v489
        %v703 = vunpack.c.h.b16 %v489
        %v704 = vunpack.c.l.b16 %v490
        %v705 = vunpack.c.h.b16 %v490
        %v706 = vunpack.c.l.b16 %v491
        %v707 = vunpack.c.h.b16 %v491
        %v708 = vunpack.c.l.b16 %v492
        %v709 = vunpack.c.h.b16 %v492
        %v710 = vunpack.c.l.b16 %v493
        %v711 = vunpack.c.h.b16 %v493
        %v712 = vunpack.c.l.b16 %v494
        %v713 = vunpack.c.h.b16 %v494
        %v714 = vunpack.c.l.b16 %v495
        %v715 = vunpack.c.h.b16 %v495
        %v716 = vunpack.c.l.b16 %v496
        %v717 = vunpack.c.h.b16 %v496
        %v718 = vunpack.c.l.b16 %v497
        %v719 = vunpack.c.h.b16 %v497
        %v720 = vunpack.c.l.b16 %v498
        %v721 = vunpack.c.h.b16 %v498
        %v722 = vunpack.c.l.b16 %v499
        %v723 = vunpack.c.h.b16 %v499
        %v724 = vpack.c.b16 %v598, %v596
        %v725 = vpack.c.b16 %v599, %v597
        %v726 = vpack.c.b16 %v602, %v600
        %v727 = vpack.c.b16 %v603, %v601
        %v728 = vpack.c.b16 %v606, %v604
        %v729 = vpack.c.b16 %v607, %v605
        %v730 = vpack.c.b16 %v610, %v608
        %v731 = vpack.c.b16 %v611, %v609
        %v732 = vpack.c.b16 %v614, %v612
        %v733 = vpack.c.b16 %v615, %v613
        %v734 = vpack.c.b16 %v618, %v616
        %v735 = vpack.c.b16 %v619, %v617
        %v736 = vpack.c.b16 %v622, %v620
        %v737 = vpack.c.b16 %v623, %v621
        %v738 = vpack.c.b16 %v626, %v624
        %v739 = vpack.c.b16 %v627, %v625
        %v740 = vpack.c.b16 %v630, %v628
        %v741 = vpack.c.b16 %v631, %v629
        %v742 = vpack.c.b16 %v634, %v632
        %v743 = vpack.c.b16 %v635, %v633
        %v744 = vpack.c.b16 %v638, %v636
        %v745 = vpack.c.b16 %v639, %v637
        %v746 = vpack.c.b16 %v642, %v640
        %v747 = vpack.c.b16 %v643, %v641
        %v748 = vpack.c.b16 %v646, %v644
        %v749 = vpack.c.b16 %v647, %v645
        %v750 = vpack.c.b16 %v650, %v648
        %v751 = vpack.c.b16 %v651, %v649
        %v752 = vpack.c.b16 %v654, %v652
        %v753 = vpack.c.b16 %v655, %v653
        %v754 = vpack.c.b16 %v658, %v656
        %v755 = vpack.c.b16 %v659, %v657
        %v756 = vpack.c.b16 %v662, %v660
        %v757 = vpack.c.b16 %v663, %v661
        %v758 = vpack.c.b16 %v666, %v664
        %v759 = vpack.c.b16 %v667, %v665
        %v760 = vpack.c.b16 %v670, %v668
        %v761 = vpack.c.b16 %v671, %v669
        %v762 = vpack.c.b16 %v674, %v672
        %v763 = vpack.c.b16 %v675, %v673
        %v764 = vpack.c.b16 %v678, %v676
        %v765 = vpack.c.b16 %v679, %v677
        %v766 = vpack.c.b16 %v682, %v680
        %v767 = vpack.c.b16 %v683, %v681
        %v768 = vpack.c.b16 %v686, %v684
        %v769 = vpack.c.b16 %v687, %v685
        %v770 = vpack.c.b16 %v690, %v688
        %v771 = vpack.c.b16 %v691, %v689
        %v772 = vpack.c.b16 %v694, %v692
        %v773 = vpack.c.b16 %v695, %v693
        %v774 = vpack.c.b16 %v698, %v696
        %v775 = vpack.c.b16 %v699, %v697
        %v776 = vpack.c.b16 %v702, %v700
        %v777 = vpack.c.b16 %v703, %v701
        %v778 = vpack.c.b16 %v706, %v704
        %v779 = vpack.c.b16 %v707, %v705
        %v780 = vpack.c.b16 %v710, %v708
        %v781 = vpack.c.b16 %v711, %v709
        %v782 = vpack.c.b16 %v714, %v712
        %v783 = vpack.c.b16 %v715, %v713
        %v784 = vpack.c.b16 %v718, %v716
        %v785 = vpack.c.b16 %v719, %v717
        %v786 = vpack.c.b16 %v722, %v720
        %v787 = vpack.c.b16 %v723, %v721
        %v884 = vunpack.c.l.b16 %v500
        %v885 = vunpack.c.l.b16 %v501
        %v886 = vunpack.c.l.b16 %v502
        %v887 = vunpack.c.l.b16 %v503
        %v888 = vunpack.c.l.b16 %v504
        %v889 = vunpack.c.l.b16 %v505
        %v890 = vunpack.c.l.b16 %v506
        %v891 = vunpack.c.l.b16 %v507
        %v892 = vunpack.c.l.b16 %v508
        %v893 = vunpack.c.l.b16 %v509
        %v894 = vunpack.c.l.b16 %v510
        %v895 = vunpack.c.l.b16 %v511
        %v896 = vunpack.c.l.b16 %v512
        %v897 = vunpack.c.l.b16 %v513
        %v898 = vunpack.c.l.b16 %v514
        %v899 = vunpack.c.l.b16 %v515
        %v900 = vunpack.c.l.b16 %v516
        %v901 = vunpack.c.l.b16 %v517
        %v902 = vunpack.c.l.b16 %v518
        %v903 = vunpack.c.l.b16 %v519
        %v904 = vunpack.c.l.b16 %v520
        %v905 = vunpack.c.l.b16 %v521
        %v906 = vunpack.c.l.b16 %v522
        %v907 = vunpack.c.l.b16 %v523
        %v908 = vunpack.c.l.b16 %v524
        %v909 = vunpack.c.l.b16 %v525
        %v910 = vunpack.c.l.b16 %v526
        %v911 = vunpack.c.l.b16 %v527
        %v912 = vunpack.c.l.b16 %v528
        %v913 = vunpack.c.l.b16 %v529
        %v914 = vunpack.c.l.b16 %v530
        %v915 = vunpack.c.l.b16 %v531
        %v916 = vpack.c.b16 %v885, %v884
        %v917 = vpack.c.b16 %v887, %v886
        %v918 = vpack.c.b16 %v889, %v888
        %v919 = vpack.c.b16 %v891, %v890
        %v920 = vpack.c.b16 %v893, %v892
        %v921 = vpack.c.b16 %v895, %v894
        %v922 = vpack.c.b16 %v897, %v896
        %v923 = vpack.c.b16 %v899, %v898
        %v924 = vpack.c.b16 %v901, %v900
        %v925 = vpack.c.b16 %v903, %v902
        %v926 = vpack.c.b16 %v905, %v904
        %v927 = vpack.c.b16 %v907, %v906
        %v928 = vpack.c.b16 %v909, %v908
        %v929 = vpack.c.b16 %v911, %v910
        %v930 = vpack.c.b16 %v913, %v912
        %v931 = vpack.c.b16 %v915, %v914
        %948 = vmatpush.bf16.msra.mxu0 %v923
        %949 = vmatpush.bf16.msra.mxu0 %v922
        %950 = vmatpush.bf16.msra.mxu0 %v921
        %951 = vmatpush.bf16.msra.mxu0 %v920
        %952 = vmatpush.bf16.msra.mxu0 %v919
        %953 = vmatpush.bf16.msra.mxu0 %v918
        %954 = vmatpush.bf16.msra.mxu0 %v917
        %955 = vmatpush.bf16.msra.mxu0 %v916
        %956 = vmatmul.bf16.gmra.mxu0 %v724
        %v957 = vpop.f32.mrf.mxu0
        %v958 = vadd.f32 0.0, %v957
        %v959 = vpop.f32.mrf.mxu0
        %v960 = vadd.f32 0.0, %v959
        %961 = vmatmul.bf16.gmra.mxu0 %v726
        %v962 = vpop.f32.mrf.mxu0
        %v963 = vadd.f32 0.0, %v962
        %v964 = vpop.f32.mrf.mxu0
        %v965 = vadd.f32 0.0, %v964
        %966 = vmatmul.bf16.gmra.mxu0 %v728
        %v967 = vpop.f32.mrf.mxu0
        %v968 = vadd.f32 0.0, %v967
        %v969 = vpop.f32.mrf.mxu0
        %v970 = vadd.f32 0.0, %v969
        %971 = vmatmul.bf16.gmra.mxu0 %v730
        %v972 = vpop.f32.mrf.mxu0
        %v973 = vadd.f32 0.0, %v972
        %v974 = vpop.f32.mrf.mxu0
        %v975 = vadd.f32 0.0, %v974
        %976 = vmatmul.bf16.gmra.mxu0 %v732
        %v977 = vpop.f32.mrf.mxu0
        %v978 = vadd.f32 0.0, %v977
        %v979 = vpop.f32.mrf.mxu0
        %v980 = vadd.f32 0.0, %v979
        %981 = vmatmul.bf16.gmra.mxu0 %v734
        %v982 = vpop.f32.mrf.mxu0
        %v983 = vadd.f32 0.0, %v982
        %v984 = vpop.f32.mrf.mxu0
        %v985 = vadd.f32 0.0, %v984
        %986 = vmatmul.bf16.gmra.mxu0 %v736
        %v987 = vpop.f32.mrf.mxu0
        %v988 = vadd.f32 0.0, %v987
        %v989 = vpop.f32.mrf.mxu0
        %v990 = vadd.f32 0.0, %v989
        %991 = vmatmul.bf16.gmra.mxu0 %v738
        %v992 = vpop.f32.mrf.mxu0
        %v993 = vadd.f32 0.0, %v992
        %v994 = vpop.f32.mrf.mxu0
        %v995 = vadd.f32 0.0, %v994
        %996 = vmatmul.bf16.gmra.mxu0 %v740
        %v997 = vpop.f32.mrf.mxu0
        %v998 = vadd.f32 0.0, %v997
        %v999 = vpop.f32.mrf.mxu0
        %v1000 = vadd.f32 0.0, %v999
        %1001 = vmatmul.bf16.gmra.mxu0 %v742
        %v1002 = vpop.f32.mrf.mxu0
        %v1003 = vadd.f32 0.0, %v1002
        %v1004 = vpop.f32.mrf.mxu0
        %v1005 = vadd.f32 0.0, %v1004
        %1006 = vmatmul.bf16.gmra.mxu0 %v744
        %v1007 = vpop.f32.mrf.mxu0
        %v1008 = vadd.f32 0.0, %v1007
        %v1009 = vpop.f32.mrf.mxu0
        %v1010 = vadd.f32 0.0, %v1009
        %1011 = vmatmul.bf16.gmra.mxu0 %v746
        %v1012 = vpop.f32.mrf.mxu0
        %v1013 = vadd.f32 0.0, %v1012
        %v1014 = vpop.f32.mrf.mxu0
        %v1015 = vadd.f32 0.0, %v1014
        %1016 = vmatmul.bf16.gmra.mxu0 %v748
        %v1017 = vpop.f32.mrf.mxu0
        %v1018 = vadd.f32 0.0, %v1017
        %v1019 = vpop.f32.mrf.mxu0
        %v1020 = vadd.f32 0.0, %v1019
        %1021 = vmatmul.bf16.gmra.mxu0 %v750
        %v1022 = vpop.f32.mrf.mxu0
        %v1023 = vadd.f32 0.0, %v1022
        %v1024 = vpop.f32.mrf.mxu0
        %v1025 = vadd.f32 0.0, %v1024
        %1026 = vmatmul.bf16.gmra.mxu0 %v752
        %v1027 = vpop.f32.mrf.mxu0
        %v1028 = vadd.f32 0.0, %v1027
        %v1029 = vpop.f32.mrf.mxu0
        %v1030 = vadd.f32 0.0, %v1029
        %1031 = vmatmul.bf16.gmra.mxu0 %v754
        %v1032 = vpop.f32.mrf.mxu0
        %v1033 = vadd.f32 0.0, %v1032
        %v1034 = vpop.f32.mrf.mxu0
        %v1035 = vadd.f32 0.0, %v1034
        %1036 = vmatmul.bf16.gmra.mxu0 %v756
        %v1037 = vpop.f32.mrf.mxu0
        %v1038 = vadd.f32 0.0, %v1037
        %v1039 = vpop.f32.mrf.mxu0
        %v1040 = vadd.f32 0.0, %v1039
        %1041 = vmatmul.bf16.gmra.mxu0 %v758
        %v1042 = vpop.f32.mrf.mxu0
        %v1043 = vadd.f32 0.0, %v1042
        %v1044 = vpop.f32.mrf.mxu0
        %v1045 = vadd.f32 0.0, %v1044
        %1046 = vmatmul.bf16.gmra.mxu0 %v760
        %v1047 = vpop.f32.mrf.mxu0
        %v1048 = vadd.f32 0.0, %v1047
        %v1049 = vpop.f32.mrf.mxu0
        %v1050 = vadd.f32 0.0, %v1049
        %1051 = vmatmul.bf16.gmra.mxu0 %v762
        %v1052 = vpop.f32.mrf.mxu0
        %v1053 = vadd.f32 0.0, %v1052
        %v1054 = vpop.f32.mrf.mxu0
        %v1055 = vadd.f32 0.0, %v1054
        %1056 = vmatmul.bf16.gmra.mxu0 %v764
        %v1057 = vpop.f32.mrf.mxu0
        %v1058 = vadd.f32 0.0, %v1057
        %v1059 = vpop.f32.mrf.mxu0
        %v1060 = vadd.f32 0.0, %v1059
        %1061 = vmatmul.bf16.gmra.mxu0 %v766
        %v1062 = vpop.f32.mrf.mxu0
        %v1063 = vadd.f32 0.0, %v1062
        %v1064 = vpop.f32.mrf.mxu0
        %v1065 = vadd.f32 0.0, %v1064
        %1066 = vmatmul.bf16.gmra.mxu0 %v768
        %v1067 = vpop.f32.mrf.mxu0
        %v1068 = vadd.f32 0.0, %v1067
        %v1069 = vpop.f32.mrf.mxu0
        %v1070 = vadd.f32 0.0, %v1069
        %1071 = vmatmul.bf16.gmra.mxu0 %v770
        %v1072 = vpop.f32.mrf.mxu0
        %v1073 = vadd.f32 0.0, %v1072
        %v1074 = vpop.f32.mrf.mxu0
        %v1075 = vadd.f32 0.0, %v1074
        %1076 = vmatmul.bf16.gmra.mxu0 %v772
        %v1077 = vpop.f32.mrf.mxu0
        %v1078 = vadd.f32 0.0, %v1077
        %v1079 = vpop.f32.mrf.mxu0
        %v1080 = vadd.f32 0.0, %v1079
        %1081 = vmatmul.bf16.gmra.mxu0 %v774
        %v1082 = vpop.f32.mrf.mxu0
        %v1083 = vadd.f32 0.0, %v1082
        %v1084 = vpop.f32.mrf.mxu0
        %v1085 = vadd.f32 0.0, %v1084
        %1086 = vmatmul.bf16.gmra.mxu0 %v776
        %v1087 = vpop.f32.mrf.mxu0
        %v1088 = vadd.f32 0.0, %v1087
        %v1089 = vpop.f32.mrf.mxu0
        %v1090 = vadd.f32 0.0, %v1089
        %1091 = vmatmul.bf16.gmra.mxu0 %v778
        %v1092 = vpop.f32.mrf.mxu0
        %v1093 = vadd.f32 0.0, %v1092
        %v1094 = vpop.f32.mrf.mxu0
        %v1095 = vadd.f32 0.0, %v1094
        %1096 = vmatmul.bf16.gmra.mxu0 %v780
        %v1097 = vpop.f32.mrf.mxu0
        %v1098 = vadd.f32 0.0, %v1097
        %v1099 = vpop.f32.mrf.mxu0
        %v1100 = vadd.f32 0.0, %v1099
        %1101 = vmatmul.bf16.gmra.mxu0 %v782
        %v1102 = vpop.f32.mrf.mxu0
        %v1103 = vadd.f32 0.0, %v1102
        %v1104 = vpop.f32.mrf.mxu0
        %v1105 = vadd.f32 0.0, %v1104
        %1106 = vmatmul.bf16.gmra.mxu0 %v784
        %v1107 = vpop.f32.mrf.mxu0
        %v1108 = vadd.f32 0.0, %v1107
        %v1109 = vpop.f32.mrf.mxu0
        %v1110 = vadd.f32 0.0, %v1109
        %1111 = vmatmul.bf16.gmra.mxu0 %v786
        %v1112 = vpop.f32.mrf.mxu0
        %v1113 = vadd.f32 0.0, %v1112
        %v1114 = vpop.f32.mrf.mxu0
        %v1115 = vadd.f32 0.0, %v1114
        %1116 = vdwg.mxu0
        %1117 = vmatpush.bf16.msra.mxu0 %v931
        %1118 = vmatpush.bf16.msra.mxu0 %v930
        %1119 = vmatpush.bf16.msra.mxu0 %v929
        %1120 = vmatpush.bf16.msra.mxu0 %v928
        %1121 = vmatpush.bf16.msra.mxu0 %v927
        %1122 = vmatpush.bf16.msra.mxu0 %v926
        %1123 = vmatpush.bf16.msra.mxu0 %v925
        %1124 = vmatpush.bf16.msra.mxu0 %v924
        %1125 = vmatmul.bf16.gmra.mxu0 %v725
        %v1126 = vpop.f32.mrf.mxu0
        %v1127 = vadd.f32 %v958, %v1126
        %v1128 = vpop.f32.mrf.mxu0
        %v1129 = vadd.f32 %v960, %v1128
        %1130 = vmatmul.bf16.gmra.mxu0 %v727
        %v1131 = vpop.f32.mrf.mxu0
        %v1132 = vadd.f32 %v963, %v1131
        %v1133 = vpop.f32.mrf.mxu0
        %v1134 = vadd.f32 %v965, %v1133
        %1135 = vmatmul.bf16.gmra.mxu0 %v729
        %v1136 = vpop.f32.mrf.mxu0
        %v1137 = vadd.f32 %v968, %v1136
        %v1138 = vpop.f32.mrf.mxu0
        %v1139 = vadd.f32 %v970, %v1138
        %1140 = vmatmul.bf16.gmra.mxu0 %v731
        %v1141 = vpop.f32.mrf.mxu0
        %v1142 = vadd.f32 %v973, %v1141
        %v1143 = vpop.f32.mrf.mxu0
        %v1144 = vadd.f32 %v975, %v1143
        %1145 = vmatmul.bf16.gmra.mxu0 %v733
        %v1146 = vpop.f32.mrf.mxu0
        %v1147 = vadd.f32 %v978, %v1146
        %v1148 = vpop.f32.mrf.mxu0
        %v1149 = vadd.f32 %v980, %v1148
        %1150 = vmatmul.bf16.gmra.mxu0 %v735
        %v1151 = vpop.f32.mrf.mxu0
        %v1152 = vadd.f32 %v983, %v1151
        %v1153 = vpop.f32.mrf.mxu0
        %v1154 = vadd.f32 %v985, %v1153
        %1155 = vmatmul.bf16.gmra.mxu0 %v737
        %v1156 = vpop.f32.mrf.mxu0
        %v1157 = vadd.f32 %v988, %v1156
        %v1158 = vpop.f32.mrf.mxu0
        %v1159 = vadd.f32 %v990, %v1158
        %1160 = vmatmul.bf16.gmra.mxu0 %v739
        %v1161 = vpop.f32.mrf.mxu0
        %v1162 = vadd.f32 %v993, %v1161
        %v1163 = vpop.f32.mrf.mxu0
        %v1164 = vadd.f32 %v995, %v1163
        %1165 = vmatmul.bf16.gmra.mxu0 %v741
        %v1166 = vpop.f32.mrf.mxu0
        %v1167 = vadd.f32 %v998, %v1166
        %v1168 = vpop.f32.mrf.mxu0
        %v1169 = vadd.f32 %v1000, %v1168
        %1170 = vmatmul.bf16.gmra.mxu0 %v743
        %v1171 = vpop.f32.mrf.mxu0
        %v1172 = vadd.f32 %v1003, %v1171
        %v1173 = vpop.f32.mrf.mxu0
        %v1174 = vadd.f32 %v1005, %v1173
        %1175 = vmatmul.bf16.gmra.mxu0 %v745
        %v1176 = vpop.f32.mrf.mxu0
        %v1177 = vadd.f32 %v1008, %v1176
        %v1178 = vpop.f32.mrf.mxu0
        %v1179 = vadd.f32 %v1010, %v1178
        %1180 = vmatmul.bf16.gmra.mxu0 %v747
        %v1181 = vpop.f32.mrf.mxu0
        %v1182 = vadd.f32 %v1013, %v1181
        %v1183 = vpop.f32.mrf.mxu0
        %v1184 = vadd.f32 %v1015, %v1183
        %1185 = vmatmul.bf16.gmra.mxu0 %v749
        %v1186 = vpop.f32.mrf.mxu0
        %v1187 = vadd.f32 %v1018, %v1186
        %v1188 = vpop.f32.mrf.mxu0
        %v1189 = vadd.f32 %v1020, %v1188
        %1190 = vmatmul.bf16.gmra.mxu0 %v751
        %v1191 = vpop.f32.mrf.mxu0
        %v1192 = vadd.f32 %v1023, %v1191
        %v1193 = vpop.f32.mrf.mxu0
        %v1194 = vadd.f32 %v1025, %v1193
        %1195 = vmatmul.bf16.gmra.mxu0 %v753
        %v1196 = vpop.f32.mrf.mxu0
        %v1197 = vadd.f32 %v1028, %v1196
        %v1198 = vpop.f32.mrf.mxu0
        %v1199 = vadd.f32 %v1030, %v1198
        %1200 = vmatmul.bf16.gmra.mxu0 %v755
        %v1201 = vpop.f32.mrf.mxu0
        %v1202 = vadd.f32 %v1033, %v1201
        %v1203 = vpop.f32.mrf.mxu0
        %v1204 = vadd.f32 %v1035, %v1203
        %1205 = vmatmul.bf16.gmra.mxu0 %v757
        %v1206 = vpop.f32.mrf.mxu0
        %v1207 = vadd.f32 %v1038, %v1206
        %v1208 = vpop.f32.mrf.mxu0
        %v1209 = vadd.f32 %v1040, %v1208
        %1210 = vmatmul.bf16.gmra.mxu0 %v759
        %v1211 = vpop.f32.mrf.mxu0
        %v1212 = vadd.f32 %v1043, %v1211
        %v1213 = vpop.f32.mrf.mxu0
        %v1214 = vadd.f32 %v1045, %v1213
        %1215 = vmatmul.bf16.gmra.mxu0 %v761
        %v1216 = vpop.f32.mrf.mxu0
        %v1217 = vadd.f32 %v1048, %v1216
        %v1218 = vpop.f32.mrf.mxu0
        %v1219 = vadd.f32 %v1050, %v1218
        %1220 = vmatmul.bf16.gmra.mxu0 %v763
        %v1221 = vpop.f32.mrf.mxu0
        %v1222 = vadd.f32 %v1053, %v1221
        %v1223 = vpop.f32.mrf.mxu0
        %v1224 = vadd.f32 %v1055, %v1223
        %1225 = vmatmul.bf16.gmra.mxu0 %v765
        %v1226 = vpop.f32.mrf.mxu0
        %v1227 = vadd.f32 %v1058, %v1226
        %v1228 = vpop.f32.mrf.mxu0
        %v1229 = vadd.f32 %v1060, %v1228
        %1230 = vmatmul.bf16.gmra.mxu0 %v767
        %v1231 = vpop.f32.mrf.mxu0
        %v1232 = vadd.f32 %v1063, %v1231
        %v1233 = vpop.f32.mrf.mxu0
        %v1234 = vadd.f32 %v1065, %v1233
        %1235 = vmatmul.bf16.gmra.mxu0 %v769
        %v1236 = vpop.f32.mrf.mxu0
        %v1237 = vadd.f32 %v1068, %v1236
        %v1238 = vpop.f32.mrf.mxu0
        %v1239 = vadd.f32 %v1070, %v1238
        %1240 = vmatmul.bf16.gmra.mxu0 %v771
        %v1241 = vpop.f32.mrf.mxu0
        %v1242 = vadd.f32 %v1073, %v1241
        %v1243 = vpop.f32.mrf.mxu0
        %v1244 = vadd.f32 %v1075, %v1243
        %1245 = vmatmul.bf16.gmra.mxu0 %v773
        %v1246 = vpop.f32.mrf.mxu0
        %v1247 = vadd.f32 %v1078, %v1246
        %v1248 = vpop.f32.mrf.mxu0
        %v1249 = vadd.f32 %v1080, %v1248
        %1250 = vmatmul.bf16.gmra.mxu0 %v775
        %v1251 = vpop.f32.mrf.mxu0
        %v1252 = vadd.f32 %v1083, %v1251
        %v1253 = vpop.f32.mrf.mxu0
        %v1254 = vadd.f32 %v1085, %v1253
        %1255 = vmatmul.bf16.gmra.mxu0 %v777
        %v1256 = vpop.f32.mrf.mxu0
        %v1257 = vadd.f32 %v1088, %v1256
        %v1258 = vpop.f32.mrf.mxu0
        %v1259 = vadd.f32 %v1090, %v1258
        %1260 = vmatmul.bf16.gmra.mxu0 %v779
        %v1261 = vpop.f32.mrf.mxu0
        %v1262 = vadd.f32 %v1093, %v1261
        %v1263 = vpop.f32.mrf.mxu0
        %v1264 = vadd.f32 %v1095, %v1263
        %1265 = vmatmul.bf16.gmra.mxu0 %v781
        %v1266 = vpop.f32.mrf.mxu0
        %v1267 = vadd.f32 %v1098, %v1266
        %v1268 = vpop.f32.mrf.mxu0
        %v1269 = vadd.f32 %v1100, %v1268
        %1270 = vmatmul.bf16.gmra.mxu0 %v783
        %v1271 = vpop.f32.mrf.mxu0
        %v1272 = vadd.f32 %v1103, %v1271
        %v1273 = vpop.f32.mrf.mxu0
        %v1274 = vadd.f32 %v1105, %v1273
        %1275 = vmatmul.bf16.gmra.mxu0 %v785
        %v1276 = vpop.f32.mrf.mxu0
        %v1277 = vadd.f32 %v1108, %v1276
        %v1278 = vpop.f32.mrf.mxu0
        %v1279 = vadd.f32 %v1110, %v1278
        %1280 = vmatmul.bf16.gmra.mxu0 %v787
        %v1281 = vpop.f32.mrf.mxu0
        %v1282 = vadd.f32 %v1113, %v1281
        %v1283 = vpop.f32.mrf.mxu0
        %v1284 = vadd.f32 %v1115, %v1283
        %1285 = vdwg.mxu0
        %v1286 = vadd.f32 %v372, %v1127
        %v1287 = vadd.f32 %v373, %v1129
        %v1288 = vadd.f32 %v374, %v1132
        %v1289 = vadd.f32 %v375, %v1134
        %v1290 = vadd.f32 %v376, %v1137
        %v1291 = vadd.f32 %v377, %v1139
        %v1292 = vadd.f32 %v378, %v1142
        %v1293 = vadd.f32 %v379, %v1144
        %v1294 = vadd.f32 %v380, %v1147
        %v1295 = vadd.f32 %v381, %v1149
        %v1296 = vadd.f32 %v382, %v1152
        %v1297 = vadd.f32 %v383, %v1154
        %v1298 = vadd.f32 %v384, %v1157
        %v1299 = vadd.f32 %v385, %v1159
        %v1300 = vadd.f32 %v386, %v1162
        %v1301 = vadd.f32 %v387, %v1164
        %v1302 = vadd.f32 %v388, %v1167
        %v1303 = vadd.f32 %v389, %v1169
        %v1304 = vadd.f32 %v390, %v1172
        %v1305 = vadd.f32 %v391, %v1174
        %v1306 = vadd.f32 %v392, %v1177
        %v1307 = vadd.f32 %v393, %v1179
        %v1308 = vadd.f32 %v394, %v1182
        %v1309 = vadd.f32 %v395, %v1184
        %v1310 = vadd.f32 %v396, %v1187
        %v1311 = vadd.f32 %v397, %v1189
        %v1312 = vadd.f32 %v398, %v1192
        %v1313 = vadd.f32 %v399, %v1194
        %v1314 = vadd.f32 %v400, %v1197
        %v1315 = vadd.f32 %v401, %v1199
        %v1316 = vadd.f32 %v402, %v1202
        %v1317 = vadd.f32 %v403, %v1204
        %v1318 = vadd.f32 %v404, %v1207
        %v1319 = vadd.f32 %v405, %v1209
        %v1320 = vadd.f32 %v406, %v1212
        %v1321 = vadd.f32 %v407, %v1214
        %v1322 = vadd.f32 %v408, %v1217
        %v1323 = vadd.f32 %v409, %v1219
        %v1324 = vadd.f32 %v410, %v1222
        %v1325 = vadd.f32 %v411, %v1224
        %v1326 = vadd.f32 %v412, %v1227
        %v1327 = vadd.f32 %v413, %v1229
        %v1328 = vadd.f32 %v414, %v1232
        %v1329 = vadd.f32 %v415, %v1234
        %v1330 = vadd.f32 %v416, %v1237
        %v1331 = vadd.f32 %v417, %v1239
        %v1332 = vadd.f32 %v418, %v1242
        %v1333 = vadd.f32 %v419, %v1244
        %v1334 = vadd.f32 %v420, %v1247
        %v1335 = vadd.f32 %v421, %v1249
        %v1336 = vadd.f32 %v422, %v1252
        %v1337 = vadd.f32 %v423, %v1254
        %v1338 = vadd.f32 %v424, %v1257
        %v1339 = vadd.f32 %v425, %v1259
        %v1340 = vadd.f32 %v426, %v1262
        %v1341 = vadd.f32 %v427, %v1264
        %v1342 = vadd.f32 %v428, %v1267
        %v1343 = vadd.f32 %v429, %v1269
        %v1344 = vadd.f32 %v430, %v1272
        %v1345 = vadd.f32 %v431, %v1274
        %v1346 = vadd.f32 %v432, %v1277
        %v1347 = vadd.f32 %v433, %v1279
        %v1348 = vadd.f32 %v434, %v1282
        %v1349 = vadd.f32 %v435, %v1284
        %1350 = vst [vmem:[#allocation2] sm:$0xff] %v1286
        %1351 = vst [vmem:[#allocation2 + $0x8] sm:$0xff] %v1287
        %1352 = vst [vmem:[#allocation2 + $0x10] sm:$0xff] %v1288
        %1353 = vst [vmem:[#allocation2 + $0x18] sm:$0xff] %v1289
        %1354 = vst [vmem:[#allocation2 + $0x20] sm:$0xff] %v1290
        %1355 = vst [vmem:[#allocation2 + $0x28] sm:$0xff] %v1291
        %1356 = vst [vmem:[#allocation2 + $0x30] sm:$0xff] %v1292
        %1357 = vst [vmem:[#allocation2 + $0x38] sm:$0xff] %v1293
        %1358 = vst [vmem:[#allocation2 + $0x40] sm:$0xff] %v1294
        %1359 = vst [vmem:[#allocation2 + $0x48] sm:$0xff] %v1295
        %1360 = vst [vmem:[#allocation2 + $0x50] sm:$0xff] %v1296
        %1361 = vst [vmem:[#allocation2 + $0x58] sm:$0xff] %v1297
        %1362 = vst [vmem:[#allocation2 + $0x60] sm:$0xff] %v1298
        %1363 = vst [vmem:[#allocation2 + $0x68] sm:$0xff] %v1299
        %1364 = vst [vmem:[#allocation2 + $0x70] sm:$0xff] %v1300
        %1365 = vst [vmem:[#allocation2 + $0x78] sm:$0xff] %v1301
        %1366 = vst [vmem:[#allocation2 + $0x80] sm:$0xff] %v1302
        %1367 = vst [vmem:[#allocation2 + $0x88] sm:$0xff] %v1303
        %1368 = vst [vmem:[#allocation2 + $0x90] sm:$0xff] %v1304
        %1369 = vst [vmem:[#allocation2 + $0x98] sm:$0xff] %v1305
        %1370 = vst [vmem:[#allocation2 + $0xa0] sm:$0xff] %v1306
        %1371 = vst [vmem:[#allocation2 + $0xa8] sm:$0xff] %v1307
        %1372 = vst [vmem:[#allocation2 + $0xb0] sm:$0xff] %v1308
        %1373 = vst [vmem:[#allocation2 + $0xb8] sm:$0xff] %v1309
        %1374 = vst [vmem:[#allocation2 + $0xc0] sm:$0xff] %v1310
        %1375 = vst [vmem:[#allocation2 + $0xc8] sm:$0xff] %v1311
        %1376 = vst [vmem:[#allocation2 + $0xd0] sm:$0xff] %v1312
        %1377 = vst [vmem:[#allocation2 + $0xd8] sm:$0xff] %v1313
        %1378 = vst [vmem:[#allocation2 + $0xe0] sm:$0xff] %v1314
        %1379 = vst [vmem:[#allocation2 + $0xe8] sm:$0xff] %v1315
        %1380 = vst [vmem:[#allocation2 + $0xf0] sm:$0xff] %v1316
        %1381 = vst [vmem:[#allocation2 + $0xf8] sm:$0xff] %v1317
        %1382 = vst [vmem:[#allocation2 + $0x100] sm:$0xff] %v1318
        %1383 = vst [vmem:[#allocation2 + $0x108] sm:$0xff] %v1319
        %1384 = vst [vmem:[#allocation2 + $0x110] sm:$0xff] %v1320
        %1385 = vst [vmem:[#allocation2 + $0x118] sm:$0xff] %v1321
        %1386 = vst [vmem:[#allocation2 + $0x120] sm:$0xff] %v1322
        %1387 = vst [vmem:[#allocation2 + $0x128] sm:$0xff] %v1323
        %1388 = vst [vmem:[#allocation2 + $0x130] sm:$0xff] %v1324
        %1389 = vst [vmem:[#allocation2 + $0x138] sm:$0xff] %v1325
        %1390 = vst [vmem:[#allocation2 + $0x140] sm:$0xff] %v1326
        %1391 = vst [vmem:[#allocation2 + $0x148] sm:$0xff] %v1327
        %1392 = vst [vmem:[#allocation2 + $0x150] sm:$0xff] %v1328
        %1393 = vst [vmem:[#allocation2 + $0x158] sm:$0xff] %v1329
        %1394 = vst [vmem:[#allocation2 + $0x160] sm:$0xff] %v1330
        %1395 = vst [vmem:[#allocation2 + $0x168] sm:$0xff] %v1331
        %1396 = vst [vmem:[#allocation2 + $0x170] sm:$0xff] %v1332
        %1397 = vst [vmem:[#allocation2 + $0x178] sm:$0xff] %v1333
        %1398 = vst [vmem:[#allocation2 + $0x180] sm:$0xff] %v1334
        %1399 = vst [vmem:[#allocation2 + $0x188] sm:$0xff] %v1335
        %1400 = vst [vmem:[#allocation2 + $0x190] sm:$0xff] %v1336
        %1401 = vst [vmem:[#allocation2 + $0x198] sm:$0xff] %v1337
        %1402 = vst [vmem:[#allocation2 + $0x1a0] sm:$0xff] %v1338
        %1403 = vst [vmem:[#allocation2 + $0x1a8] sm:$0xff] %v1339
        %1404 = vst [vmem:[#allocation2 + $0x1b0] sm:$0xff] %v1340
        %1405 = vst [vmem:[#allocation2 + $0x1b8] sm:$0xff] %v1341
        %1406 = vst [vmem:[#allocation2 + $0x1c0] sm:$0xff] %v1342
        %1407 = vst [vmem:[#allocation2 + $0x1c8] sm:$0xff] %v1343
        %1408 = vst [vmem:[#allocation2 + $0x1d0] sm:$0xff] %v1344
        %1409 = vst [vmem:[#allocation2 + $0x1d8] sm:$0xff] %v1345
        %1410 = vst [vmem:[#allocation2 + $0x1e0] sm:$0xff] %v1346
        %1411 = vst [vmem:[#allocation2 + $0x1e8] sm:$0xff] %v1347
        %1412 = vst [vmem:[#allocation2 + $0x1f0] sm:$0xff] %v1348
        %1413 = vst [vmem:[#allocation2 + $0x1f8] sm:$0xff] %v1349
        // Predicated region
        $region49: #{tpu_custom_call.1} parent=35 // pred_check
          %p1414 = pneg %p304
        $region50: #{tpu_custom_call.1} parent=35 // pred_check_branch
          %1416 = sbr.rel (%p1414) target = $region52
        $region51: #{tpu_custom_call.1} parent=35 // pred_region
          %v1417 = vld [vmem:[#allocation2] sm:$0xff]
          %v1418 = vld [vmem:[#allocation2 + $0x8] sm:$0xff]
          %v1419 = vld [vmem:[#allocation2 + $0x10] sm:$0xff]
          %v1420 = vld [vmem:[#allocation2 + $0x18] sm:$0xff]
          %v1421 = vld [vmem:[#allocation2 + $0x20] sm:$0xff]
          %v1422 = vld [vmem:[#allocation2 + $0x28] sm:$0xff]
          %v1423 = vld [vmem:[#allocation2 + $0x30] sm:$0xff]
          %v1424 = vld [vmem:[#allocation2 + $0x38] sm:$0xff]
          %v1425 = vld [vmem:[#allocation2 + $0x40] sm:$0xff]
          %v1426 = vld [vmem:[#allocation2 + $0x48] sm:$0xff]
          %v1427 = vld [vmem:[#allocation2 + $0x50] sm:$0xff]
          %v1428 = vld [vmem:[#allocation2 + $0x58] sm:$0xff]
          %v1429 = vld [vmem:[#allocation2 + $0x60] sm:$0xff]
          %v1430 = vld [vmem:[#allocation2 + $0x68] sm:$0xff]
          %v1431 = vld [vmem:[#allocation2 + $0x70] sm:$0xff]
          %v1432 = vld [vmem:[#allocation2 + $0x78] sm:$0xff]
          %v1433 = vld [vmem:[#allocation2 + $0x80] sm:$0xff]
          %v1434 = vld [vmem:[#allocation2 + $0x88] sm:$0xff]
          %v1435 = vld [vmem:[#allocation2 + $0x90] sm:$0xff]
          %v1436 = vld [vmem:[#allocation2 + $0x98] sm:$0xff]
          %v1437 = vld [vmem:[#allocation2 + $0xa0] sm:$0xff]
          %v1438 = vld [vmem:[#allocation2 + $0xa8] sm:$0xff]
          %v1439 = vld [vmem:[#allocation2 + $0xb0] sm:$0xff]
          %v1440 = vld [vmem:[#allocation2 + $0xb8] sm:$0xff]
          %v1441 = vld [vmem:[#allocation2 + $0xc0] sm:$0xff]
          %v1442 = vld [vmem:[#allocation2 + $0xc8] sm:$0xff]
          %v1443 = vld [vmem:[#allocation2 + $0xd0] sm:$0xff]
          %v1444 = vld [vmem:[#allocation2 + $0xd8] sm:$0xff]
          %v1445 = vld [vmem:[#allocation2 + $0xe0] sm:$0xff]
          %v1446 = vld [vmem:[#allocation2 + $0xe8] sm:$0xff]
          %v1447 = vld [vmem:[#allocation2 + $0xf0] sm:$0xff]
          %v1448 = vld [vmem:[#allocation2 + $0xf8] sm:$0xff]
          %v1449 = vld [vmem:[#allocation2 + $0x100] sm:$0xff]
          %v1450 = vld [vmem:[#allocation2 + $0x108] sm:$0xff]
          %v1451 = vld [vmem:[#allocation2 + $0x110] sm:$0xff]
          %v1452 = vld [vmem:[#allocation2 + $0x118] sm:$0xff]
          %v1453 = vld [vmem:[#allocation2 + $0x120] sm:$0xff]
          %v1454 = vld [vmem:[#allocation2 + $0x128] sm:$0xff]
          %v1455 = vld [vmem:[#allocation2 + $0x130] sm:$0xff]
          %v1456 = vld [vmem:[#allocation2 + $0x138] sm:$0xff]
          %v1457 = vld [vmem:[#allocation2 + $0x140] sm:$0xff]
          %v1458 = vld [vmem:[#allocation2 + $0x148] sm:$0xff]
          %v1459 = vld [vmem:[#allocation2 + $0x150] sm:$0xff]
          %v1460 = vld [vmem:[#allocation2 + $0x158] sm:$0xff]
          %v1461 = vld [vmem:[#allocation2 + $0x160] sm:$0xff]
          %v1462 = vld [vmem:[#allocation2 + $0x168] sm:$0xff]
          %v1463 = vld [vmem:[#allocation2 + $0x170] sm:$0xff]
          %v1464 = vld [vmem:[#allocation2 + $0x178] sm:$0xff]
          %v1465 = vld [vmem:[#allocation2 + $0x180] sm:$0xff]
          %v1466 = vld [vmem:[#allocation2 + $0x188] sm:$0xff]
          %v1467 = vld [vmem:[#allocation2 + $0x190] sm:$0xff]
          %v1468 = vld [vmem:[#allocation2 + $0x198] sm:$0xff]
          %v1469 = vld [vmem:[#allocation2 + $0x1a0] sm:$0xff]
          %v1470 = vld [vmem:[#allocation2 + $0x1a8] sm:$0xff]
          %v1471 = vld [vmem:[#allocation2 + $0x1b0] sm:$0xff]
          %v1472 = vld [vmem:[#allocation2 + $0x1b8] sm:$0xff]
          %v1473 = vld [vmem:[#allocation2 + $0x1c0] sm:$0xff]
          %v1474 = vld [vmem:[#allocation2 + $0x1c8] sm:$0xff]
          %v1475 = vld [vmem:[#allocation2 + $0x1d0] sm:$0xff]
          %v1476 = vld [vmem:[#allocation2 + $0x1d8] sm:$0xff]
          %v1477 = vld [vmem:[#allocation2 + $0x1e0] sm:$0xff]
          %v1478 = vld [vmem:[#allocation2 + $0x1e8] sm:$0xff]
          %v1479 = vld [vmem:[#allocation2 + $0x1f0] sm:$0xff]
          %v1480 = vld [vmem:[#allocation2 + $0x1f8] sm:$0xff]
          %v1481 = vld [vmem:[%s299] sm:$0x1]
          %v1483 = vperm.slane %v1481, 0
          %v1485 = vmul.f32 %v1417, %v1483
          %v1486 = vmul.f32 %v1418, %v1483
          %v1487 = vmul.f32 %v1419, %v1483
          %v1488 = vmul.f32 %v1420, %v1483
          %v1489 = vmul.f32 %v1421, %v1483
          %v1490 = vmul.f32 %v1422, %v1483
          %v1491 = vmul.f32 %v1423, %v1483
          %v1492 = vmul.f32 %v1424, %v1483
          %v1493 = vmul.f32 %v1425, %v1483
          %v1494 = vmul.f32 %v1426, %v1483
          %v1495 = vmul.f32 %v1427, %v1483
          %v1496 = vmul.f32 %v1428, %v1483
          %v1497 = vmul.f32 %v1429, %v1483
          %v1498 = vmul.f32 %v1430, %v1483
          %v1499 = vmul.f32 %v1431, %v1483
          %v1500 = vmul.f32 %v1432, %v1483
          %v1501 = vmul.f32 %v1433, %v1483
          %v1502 = vmul.f32 %v1434, %v1483
          %v1503 = vmul.f32 %v1435, %v1483
          %v1504 = vmul.f32 %v1436, %v1483
          %v1505 = vmul.f32 %v1437, %v1483
          %v1506 = vmul.f32 %v1438, %v1483
          %v1507 = vmul.f32 %v1439, %v1483
          %v1508 = vmul.f32 %v1440, %v1483
          %v1509 = vmul.f32 %v1441, %v1483
          %v1510 = vmul.f32 %v1442, %v1483
          %v1511 = vmul.f32 %v1443, %v1483
          %v1512 = vmul.f32 %v1444, %v1483
          %v1513 = vmul.f32 %v1445, %v1483
          %v1514 = vmul.f32 %v1446, %v1483
          %v1515 = vmul.f32 %v1447, %v1483
          %v1516 = vmul.f32 %v1448, %v1483
          %v1517 = vmul.f32 %v1449, %v1483
          %v1518 = vmul.f32 %v1450, %v1483
          %v1519 = vmul.f32 %v1451, %v1483
          %v1520 = vmul.f32 %v1452, %v1483
          %v1521 = vmul.f32 %v1453, %v1483
          %v1522 = vmul.f32 %v1454, %v1483
          %v1523 = vmul.f32 %v1455, %v1483
          %v1524 = vmul.f32 %v1456, %v1483
          %v1525 = vmul.f32 %v1457, %v1483
          %v1526 = vmul.f32 %v1458, %v1483
          %v1527 = vmul.f32 %v1459, %v1483
          %v1528 = vmul.f32 %v1460, %v1483
          %v1529 = vmul.f32 %v1461, %v1483
          %v1530 = vmul.f32 %v1462, %v1483
          %v1531 = vmul.f32 %v1463, %v1483
          %v1532 = vmul.f32 %v1464, %v1483
          %v1533 = vmul.f32 %v1465, %v1483
          %v1534 = vmul.f32 %v1466, %v1483
          %v1535 = vmul.f32 %v1467, %v1483
          %v1536 = vmul.f32 %v1468, %v1483
          %v1537 = vmul.f32 %v1469, %v1483
          %v1538 = vmul.f32 %v1470, %v1483
          %v1539 = vmul.f32 %v1471, %v1483
          %v1540 = vmul.f32 %v1472, %v1483
          %v1541 = vmul.f32 %v1473, %v1483
          %v1542 = vmul.f32 %v1474, %v1483
          %v1543 = vmul.f32 %v1475, %v1483
          %v1544 = vmul.f32 %v1476, %v1483
          %v1545 = vmul.f32 %v1477, %v1483
          %v1546 = vmul.f32 %v1478, %v1483
          %v1547 = vmul.f32 %v1479, %v1483
          %v1548 = vmul.f32 %v1480, %v1483
          %v1549 = vld [vmem:[%s302] sm:$0x1]
          %v1551 = vperm.slane %v1549, 0
          %v1553 = vadd.f32 %v1485, %v1551
          %v1554 = vadd.f32 %v1486, %v1551
          %v1555 = vadd.f32 %v1487, %v1551
          %v1556 = vadd.f32 %v1488, %v1551
          %v1557 = vadd.f32 %v1489, %v1551
          %v1558 = vadd.f32 %v1490, %v1551
          %v1559 = vadd.f32 %v1491, %v1551
          %v1560 = vadd.f32 %v1492, %v1551
          %v1561 = vadd.f32 %v1493, %v1551
          %v1562 = vadd.f32 %v1494, %v1551
          %v1563 = vadd.f32 %v1495, %v1551
          %v1564 = vadd.f32 %v1496, %v1551
          %v1565 = vadd.f32 %v1497, %v1551
          %v1566 = vadd.f32 %v1498, %v1551
          %v1567 = vadd.f32 %v1499, %v1551
          %v1568 = vadd.f32 %v1500, %v1551
          %v1569 = vadd.f32 %v1501, %v1551
          %v1570 = vadd.f32 %v1502, %v1551
          %v1571 = vadd.f32 %v1503, %v1551
          %v1572 = vadd.f32 %v1504, %v1551
          %v1573 = vadd.f32 %v1505, %v1551
          %v1574 = vadd.f32 %v1506, %v1551
          %v1575 = vadd.f32 %v1507, %v1551
          %v1576 = vadd.f32 %v1508, %v1551
          %v1577 = vadd.f32 %v1509, %v1551
          %v1578 = vadd.f32 %v1510, %v1551
          %v1579 = vadd.f32 %v1511, %v1551
          %v1580 = vadd.f32 %v1512, %v1551
          %v1581 = vadd.f32 %v1513, %v1551
          %v1582 = vadd.f32 %v1514, %v1551
          %v1583 = vadd.f32 %v1515, %v1551
          %v1584 = vadd.f32 %v1516, %v1551
          %v1585 = vadd.f32 %v1517, %v1551
          %v1586 = vadd.f32 %v1518, %v1551
          %v1587 = vadd.f32 %v1519, %v1551
          %v1588 = vadd.f32 %v1520, %v1551
          %v1589 = vadd.f32 %v1521, %v1551
          %v1590 = vadd.f32 %v1522, %v1551
          %v1591 = vadd.f32 %v1523, %v1551
          %v1592 = vadd.f32 %v1524, %v1551
          %v1593 = vadd.f32 %v1525, %v1551
          %v1594 = vadd.f32 %v1526, %v1551
          %v1595 = vadd.f32 %v1527, %v1551
          %v1596 = vadd.f32 %v1528, %v1551
          %v1597 = vadd.f32 %v1529, %v1551
          %v1598 = vadd.f32 %v1530, %v1551
          %v1599 = vadd.f32 %v1531, %v1551
          %v1600 = vadd.f32 %v1532, %v1551
          %v1601 = vadd.f32 %v1533, %v1551
          %v1602 = vadd.f32 %v1534, %v1551
          %v1603 = vadd.f32 %v1535, %v1551
          %v1604 = vadd.f32 %v1536, %v1551
          %v1605 = vadd.f32 %v1537, %v1551
          %v1606 = vadd.f32 %v1538, %v1551
          %v1607 = vadd.f32 %v1539, %v1551
          %v1608 = vadd.f32 %v1540, %v1551
          %v1609 = vadd.f32 %v1541, %v1551
          %v1610 = vadd.f32 %v1542, %v1551
          %v1611 = vadd.f32 %v1543, %v1551
          %v1612 = vadd.f32 %v1544, %v1551
          %v1613 = vadd.f32 %v1545, %v1551
          %v1614 = vadd.f32 %v1546, %v1551
          %v1615 = vadd.f32 %v1547, %v1551
          %v1616 = vadd.f32 %v1548, %v1551
          %v1617 = vmax.f32 %v1553, 0.0
          %v1618 = vmax.f32 %v1554, 0.0
          %v1619 = vmax.f32 %v1555, 0.0
          %v1620 = vmax.f32 %v1556, 0.0
          %v1621 = vmax.f32 %v1557, 0.0
          %v1622 = vmax.f32 %v1558, 0.0
          %v1623 = vmax.f32 %v1559, 0.0
          %v1624 = vmax.f32 %v1560, 0.0
          %v1625 = vmax.f32 %v1561, 0.0
          %v1626 = vmax.f32 %v1562, 0.0
          %v1627 = vmax.f32 %v1563, 0.0
          %v1628 = vmax.f32 %v1564, 0.0
          %v1629 = vmax.f32 %v1565, 0.0
          %v1630 = vmax.f32 %v1566, 0.0
          %v1631 = vmax.f32 %v1567, 0.0
          %v1632 = vmax.f32 %v1568, 0.0
          %v1633 = vmax.f32 %v1569, 0.0
          %v1634 = vmax.f32 %v1570, 0.0
          %v1635 = vmax.f32 %v1571, 0.0
          %v1636 = vmax.f32 %v1572, 0.0
          %v1637 = vmax.f32 %v1573, 0.0
          %v1638 = vmax.f32 %v1574, 0.0
          %v1639 = vmax.f32 %v1575, 0.0
          %v1640 = vmax.f32 %v1576, 0.0
          %v1641 = vmax.f32 %v1577, 0.0
          %v1642 = vmax.f32 %v1578, 0.0
          %v1643 = vmax.f32 %v1579, 0.0
          %v1644 = vmax.f32 %v1580, 0.0
          %v1645 = vmax.f32 %v1581, 0.0
          %v1646 = vmax.f32 %v1582, 0.0
          %v1647 = vmax.f32 %v1583, 0.0
          %v1648 = vmax.f32 %v1584, 0.0
          %v1649 = vmax.f32 %v1585, 0.0
          %v1650 = vmax.f32 %v1586, 0.0
          %v1651 = vmax.f32 %v1587, 0.0
          %v1652 = vmax.f32 %v1588, 0.0
          %v1653 = vmax.f32 %v1589, 0.0
          %v1654 = vmax.f32 %v1590, 0.0
          %v1655 = vmax.f32 %v1591, 0.0
          %v1656 = vmax.f32 %v1592, 0.0
          %v1657 = vmax.f32 %v1593, 0.0
          %v1658 = vmax.f32 %v1594, 0.0
          %v1659 = vmax.f32 %v1595, 0.0
          %v1660 = vmax.f32 %v1596, 0.0
          %v1661 = vmax.f32 %v1597, 0.0
          %v1662 = vmax.f32 %v1598, 0.0
          %v1663 = vmax.f32 %v1599, 0.0
          %v1664 = vmax.f32 %v1600, 0.0
          %v1665 = vmax.f32 %v1601, 0.0
          %v1666 = vmax.f32 %v1602, 0.0
          %v1667 = vmax.f32 %v1603, 0.0
          %v1668 = vmax.f32 %v1604, 0.0
          %v1669 = vmax.f32 %v1605, 0.0
          %v1670 = vmax.f32 %v1606, 0.0
          %v1671 = vmax.f32 %v1607, 0.0
          %v1672 = vmax.f32 %v1608, 0.0
          %v1673 = vmax.f32 %v1609, 0.0
          %v1674 = vmax.f32 %v1610, 0.0
          %v1675 = vmax.f32 %v1611, 0.0
          %v1676 = vmax.f32 %v1612, 0.0
          %v1677 = vmax.f32 %v1613, 0.0
          %v1678 = vmax.f32 %v1614, 0.0
          %v1679 = vmax.f32 %v1615, 0.0
          %v1680 = vmax.f32 %v1616, 0.0
          %v1681 = vpack.c.bf16 %v1617, %v1617
          %v1682 = vpack.c.bf16 %v1618, %v1618
          %v1683 = vpack.c.bf16 %v1619, %v1619
          %v1684 = vpack.c.bf16 %v1620, %v1620
          %v1685 = vpack.c.bf16 %v1621, %v1621
          %v1686 = vpack.c.bf16 %v1622, %v1622
          %v1687 = vpack.c.bf16 %v1623, %v1623
          %v1688 = vpack.c.bf16 %v1624, %v1624
          %v1689 = vpack.c.bf16 %v1625, %v1625
          %v1690 = vpack.c.bf16 %v1626, %v1626
          %v1691 = vpack.c.bf16 %v1627, %v1627
          %v1692 = vpack.c.bf16 %v1628, %v1628
          %v1693 = vpack.c.bf16 %v1629, %v1629
          %v1694 = vpack.c.bf16 %v1630, %v1630
          %v1695 = vpack.c.bf16 %v1631, %v1631
          %v1696 = vpack.c.bf16 %v1632, %v1632
          %v1697 = vpack.c.bf16 %v1633, %v1633
          %v1698 = vpack.c.bf16 %v1634, %v1634
          %v1699 = vpack.c.bf16 %v1635, %v1635
          %v1700 = vpack.c.bf16 %v1636, %v1636
          %v1701 = vpack.c.bf16 %v1637, %v1637
          %v1702 = vpack.c.bf16 %v1638, %v1638
          %v1703 = vpack.c.bf16 %v1639, %v1639
          %v1704 = vpack.c.bf16 %v1640, %v1640
          %v1705 = vpack.c.bf16 %v1641, %v1641
          %v1706 = vpack.c.bf16 %v1642, %v1642
          %v1707 = vpack.c.bf16 %v1643, %v1643
          %v1708 = vpack.c.bf16 %v1644, %v1644
          %v1709 = vpack.c.bf16 %v1645, %v1645
          %v1710 = vpack.c.bf16 %v1646, %v1646
          %v1711 = vpack.c.bf16 %v1647, %v1647
          %v1712 = vpack.c.bf16 %v1648, %v1648
          %v1713 = vpack.c.bf16 %v1649, %v1649
          %v1714 = vpack.c.bf16 %v1650, %v1650
          %v1715 = vpack.c.bf16 %v1651, %v1651
          %v1716 = vpack.c.bf16 %v1652, %v1652
          %v1717 = vpack.c.bf16 %v1653, %v1653
          %v1718 = vpack.c.bf16 %v1654, %v1654
          %v1719 = vpack.c.bf16 %v1655, %v1655
          %v1720 = vpack.c.bf16 %v1656, %v1656
          %v1721 = vpack.c.bf16 %v1657, %v1657
          %v1722 = vpack.c.bf16 %v1658, %v1658
          %v1723 = vpack.c.bf16 %v1659, %v1659
          %v1724 = vpack.c.bf16 %v1660, %v1660
          %v1725 = vpack.c.bf16 %v1661, %v1661
          %v1726 = vpack.c.bf16 %v1662, %v1662
          %v1727 = vpack.c.bf16 %v1663, %v1663
          %v1728 = vpack.c.bf16 %v1664, %v1664
          %v1729 = vpack.c.bf16 %v1665, %v1665
          %v1730 = vpack.c.bf16 %v1666, %v1666
          %v1731 = vpack.c.bf16 %v1667, %v1667
          %v1732 = vpack.c.bf16 %v1668, %v1668
          %v1733 = vpack.c.bf16 %v1669, %v1669
          %v1734 = vpack.c.bf16 %v1670, %v1670
          %v1735 = vpack.c.bf16 %v1671, %v1671
          %v1736 = vpack.c.bf16 %v1672, %v1672
          %v1737 = vpack.c.bf16 %v1673, %v1673
          %v1738 = vpack.c.bf16 %v1674, %v1674
          %v1739 = vpack.c.bf16 %v1675, %v1675
          %v1740 = vpack.c.bf16 %v1676, %v1676
          %v1741 = vpack.c.bf16 %v1677, %v1677
          %v1742 = vpack.c.bf16 %v1678, %v1678
          %v1743 = vpack.c.bf16 %v1679, %v1679
          %v1744 = vpack.c.bf16 %v1680, %v1680
          %1745 = vst [vmem:[%s293] sm:$0xf] %v1681
          %1746 = vst [vmem:[%s293 + $0x4] sm:$0xf] %v1682
          %1747 = vst [vmem:[%s293 + $0x8] sm:$0xf] %v1683
          %1748 = vst [vmem:[%s293 + $0xc] sm:$0xf] %v1684
          %1749 = vst [vmem:[%s293 + $0x10] sm:$0xf] %v1685
          %1750 = vst [vmem:[%s293 + $0x14] sm:$0xf] %v1686
          %1751 = vst [vmem:[%s293 + $0x18] sm:$0xf] %v1687
          %1752 = vst [vmem:[%s293 + $0x1c] sm:$0xf] %v1688
          %1753 = vst [vmem:[%s293 + $0x20] sm:$0xf] %v1689
          %1754 = vst [vmem:[%s293 + $0x24] sm:$0xf] %v1690
          %1755 = vst [vmem:[%s293 + $0x28] sm:$0xf] %v1691
          %1756 = vst [vmem:[%s293 + $0x2c] sm:$0xf] %v1692
          %1757 = vst [vmem:[%s293 + $0x30] sm:$0xf] %v1693
          %1758 = vst [vmem:[%s293 + $0x34] sm:$0xf] %v1694
          %1759 = vst [vmem:[%s293 + $0x38] sm:$0xf] %v1695
          %1760 = vst [vmem:[%s293 + $0x3c] sm:$0xf] %v1696
          %1761 = vst [vmem:[%s293 + $0x40] sm:$0xf] %v1697
          %1762 = vst [vmem:[%s293 + $0x44] sm:$0xf] %v1698
          %1763 = vst [vmem:[%s293 + $0x48] sm:$0xf] %v1699
          %1764 = vst [vmem:[%s293 + $0x4c] sm:$0xf] %v1700
          %1765 = vst [vmem:[%s293 + $0x50] sm:$0xf] %v1701
          %1766 = vst [vmem:[%s293 + $0x54] sm:$0xf] %v1702
          %1767 = vst [vmem:[%s293 + $0x58] sm:$0xf] %v1703
          %1768 = vst [vmem:[%s293 + $0x5c] sm:$0xf] %v1704
          %1769 = vst [vmem:[%s293 + $0x60] sm:$0xf] %v1705
          %1770 = vst [vmem:[%s293 + $0x64] sm:$0xf] %v1706
          %1771 = vst [vmem:[%s293 + $0x68] sm:$0xf] %v1707
          %1772 = vst [vmem:[%s293 + $0x6c] sm:$0xf] %v1708
          %1773 = vst [vmem:[%s293 + $0x70] sm:$0xf] %v1709
          %1774 = vst [vmem:[%s293 + $0x74] sm:$0xf] %v1710
          %1775 = vst [vmem:[%s293 + $0x78] sm:$0xf] %v1711
          %1776 = vst [vmem:[%s293 + $0x7c] sm:$0xf] %v1712
          %1777 = vst [vmem:[%s293 + $0x80] sm:$0xf] %v1713
          %1778 = vst [vmem:[%s293 + $0x84] sm:$0xf] %v1714
          %1779 = vst [vmem:[%s293 + $0x88] sm:$0xf] %v1715
          %1780 = vst [vmem:[%s293 + $0x8c] sm:$0xf] %v1716
          %1781 = vst [vmem:[%s293 + $0x90] sm:$0xf] %v1717
          %1782 = vst [vmem:[%s293 + $0x94] sm:$0xf] %v1718
          %1783 = vst [vmem:[%s293 + $0x98] sm:$0xf] %v1719
          %1784 = vst [vmem:[%s293 + $0x9c] sm:$0xf] %v1720
          %1785 = vst [vmem:[%s293 + $0xa0] sm:$0xf] %v1721
          %1786 = vst [vmem:[%s293 + $0xa4] sm:$0xf] %v1722
          %1787 = vst [vmem:[%s293 + $0xa8] sm:$0xf] %v1723
          %1788 = vst [vmem:[%s293 + $0xac] sm:$0xf] %v1724
          %1789 = vst [vmem:[%s293 + $0xb0] sm:$0xf] %v1725
          %1790 = vst [vmem:[%s293 + $0xb4] sm:$0xf] %v1726
          %1791 = vst [vmem:[%s293 + $0xb8] sm:$0xf] %v1727
          %1792 = vst [vmem:[%s293 + $0xbc] sm:$0xf] %v1728
          %1793 = vst [vmem:[%s293 + $0xc0] sm:$0xf] %v1729
          %1794 = vst [vmem:[%s293 + $0xc4] sm:$0xf] %v1730
          %1795 = vst [vmem:[%s293 + $0xc8] sm:$0xf] %v1731
          %1796 = vst [vmem:[%s293 + $0xcc] sm:$0xf] %v1732
          %1797 = vst [vmem:[%s293 + $0xd0] sm:$0xf] %v1733
          %1798 = vst [vmem:[%s293 + $0xd4] sm:$0xf] %v1734
          %1799 = vst [vmem:[%s293 + $0xd8] sm:$0xf] %v1735
          %1800 = vst [vmem:[%s293 + $0xdc] sm:$0xf] %v1736
          %1801 = vst [vmem:[%s293 + $0xe0] sm:$0xf] %v1737
          %1802 = vst [vmem:[%s293 + $0xe4] sm:$0xf] %v1738
          %1803 = vst [vmem:[%s293 + $0xe8] sm:$0xf] %v1739
          %1804 = vst [vmem:[%s293 + $0xec] sm:$0xf] %v1740
          %1805 = vst [vmem:[%s293 + $0xf0] sm:$0xf] %v1741
          %1806 = vst [vmem:[%s293 + $0xf4] sm:$0xf] %v1742
          %1807 = vst [vmem:[%s293 + $0xf8] sm:$0xf] %v1743
          %1808 = vst [vmem:[%s293 + $0xfc] sm:$0xf] %v1744
        $region52: #{tpu_custom_call.1} parent=35 // pred_fallthru
          _
        %s1809 = sand.u32 %s159, 1
        %s1810 = scalar_lea.sflag [#allocation5], %s1809
        %s1811 = sand.u32 %s159, 1
        %s1812 = smul.addr %s1811, 256
        %s1813 = scalar_lea.vmem [#allocation8], %s1812
        // Predicated region
        $region53: #{tpu_custom_call.1} parent=35 // pred_check
          %p1814 = pneg %p169
        $region54: #{tpu_custom_call.1} parent=35 // pred_check_branch
          %1816 = sbr.rel (%p1814) target = $region56
        $region55: #{tpu_custom_call.1} parent=35 // pred_region
          %s1817 = smul.u32 64, %s27
          %1819 = vsyncadd %s1810, 0
          %s1820 = sadd.s32 %s28, %s1817
          %s1821 = smul.addr %s1820, 4
          %s1822 = scalar_lea.hbm %s4, %s1821
          %s1823 = sshll.u32 %s1813, 4
          %s1824 = int_to_ptr.vmem [resolvable:$true] %s1823
          %s1825 = sshll.u32 %s1822, 4
          %s1826 = int_to_ptr.hbm [resolvable:$true] %s1825
          %1831 = dma.vmem_to_hbm [thread:$0]  %s1824, 4096, %s1826, %s1810, 64, 64, 4
        $region56: #{tpu_custom_call.1} parent=35 // pred_fallthru
          _
      $region36: #{tpu_custom_call.1} parent=5 // pred_fallthru
        _
      %p1832 = scmp.le.s32.totalorder 2, %s17
      // Predicated region
      $region57: #{tpu_custom_call.1} parent=5 // pred_check
        %p1833 = pneg %p1832
      $region58: #{tpu_custom_call.1} parent=5 // pred_check_branch
        %1835 = sbr.rel (%p1833) target = $region60
      $region59: #{tpu_custom_call.1} parent=5 // pred_region
        %s1836 = ssub.s32 %s17, 2
        // Predicated region
        $region61: #{tpu_custom_call.1} parent=59 // pred_check
          %p1837 = pneg %p175
        $region62: #{tpu_custom_call.1} parent=59 // pred_check_branch
          %1839 = sbr.rel (%p1837) target = $region64
        $region63: #{tpu_custom_call.1} parent=59 // pred_region
          %s1840 = sand.u32 %s160, 1
          %s1841 = scalar_lea.sflag [#allocation5], %s1840
          %s1842 = sand.u32 %s160, 1
          %s1843 = smul.addr %s1842, 256
          %s1844 = scalar_lea.vmem [#allocation8], %s1843
          %1846 = dma.done %s1841, 4096
        $region64: #{tpu_custom_call.1} parent=59 // pred_fallthru
          _
      $region60: #{tpu_custom_call.1} parent=5 // pred_fallthru
        _
    $region6: #{tpu_custom_call.1} parent=1 // loop_footer
      %s21 = sadd.s32 1, %s17
    $region7: #{tpu_custom_call.1} parent=1 // loop_footer_branch
      %16 = sbr.rel target = $region3
    $region8: #{tpu_custom_call.1} parent=1 // loop_exit
      _
    %1847 = vsyncpa [#allocation4], 1
    %s1848 = scalar_lea.sflag [#allocation4], 1
    %1849 = vsyncpa %s1848, 1
    %1850 = vsyncpa [#allocation7], 1
    %1851 = vsyncpa [#allocation5], 1
    %s1852 = scalar_lea.sflag [#allocation5], 1
    %1853 = vsyncpa %s1852, 1

</llo_original>
